<compile_context>
chip_gen: v5e
topology: v5e:2x2
jax: 0.10.0
libtpu: 0.0.40
codegen_flags: <defaults>
</compile_context>

<pallas_src>
import jax
import jax.numpy as jnp
from jax.experimental import pallas as pl
from jax.experimental.pallas import tpu as pltpu

# ---------------- model hyper-parameters (small, consistent with the module) ----------------
VOCAB_SIZE = 50
EMBEDDING_SIZE = 16
HIDDEN_SIZE = 32
NUM_LAYERS = 2
BIDIRECTIONAL = True          # fused kernel below assumes the bidirectional configuration
DROPOUT_RATIO = 0.5           # identity at inference
OUT_SIZE = 4

SEQ_LEN = 8
BATCH = 2

VOCAB_PAD = ((VOCAB_SIZE + 127) // 128) * 128   # lane-aligned padded vocab for the one-hot matmul


# ---------------- fused Pallas kernel ----------------
def _textrnn_kernel(ids_ref, emb_ref, *args):
    """Fused TextRNN forward.

    ids_ref : VMEM (T*B, 1) int32 token ids, row t*B + b == text[t, b]
    emb_ref : VMEM (Vpad, E) embedding table (rows >= VOCAB_SIZE are zero padding)
    args    : (w_ih_l0, w_hh_l0, b_l0, w_ih_l1, w_hh_l1, b_l1,
               lin_w, lin_b, out_ref, y_scratch)
        w_ih : (2, D_in, 4H)   fwd/bwd input weights, transposed, gate order (i,f,g,o)
        w_hh : (2H, 4H)        [W_hh_fwd.T ; W_hh_bwd.T] stacked on rows
        b    : (2, 1, 4H)      b_ih + b_hh per direction
        lin_w: (2H, OUT), lin_b: (1, OUT)
        out_ref  : (B, OUT)
        y_scratch: VMEM (T*B, 2H) inter-layer activation slab
    """
    out_ref = args[-2]
    y_ref = args[-1]
    lin_w_ref = args[-4]
    lin_b_ref = args[-3]
    layer_refs = args[:-4]
    num_layers = len(layer_refs) // 3

    TB = ids_ref.shape[0]
    B = out_ref.shape[0]
    T = TB // B
    V = emb_ref.shape[0]
    H = layer_refs[1].shape[-1] // 4          # w_hh: (2H, 4H)
    f32 = jnp.float32

    # ---- embedding gather as a single one-hot matmul (dropout(embed) == identity) ----
    ids = ids_ref[...]                                               # (TB, 1) int32
    vocab_iota = jax.lax.broadcasted_iota(jnp.int32, (TB, V), 1)
    onehot = jnp.where(vocab_iota == ids, 1.0, 0.0).astype(f32)      # (TB, V)
    x_seq = jnp.dot(onehot, emb_ref[...], preferred_element_type=f32)  # (TB, E)

    # Routing mask for the stacked bidirectional recurrent matmul:
    #   rows [0, B)  carry the forward hidden state in lanes [0, H)
    #   rows [B, 2B) carry the backward hidden state in lanes [H, 2H)
    row_i = jax.lax.broadcasted_iota(jnp.int32, (2 * B, 2 * H), 0)
    col_i = jax.lax.broadcasted_iota(jnp.int32, (2 * B, 2 * H), 1)
    dir_mask = jnp.where((row_i < B) == (col_i < H), 1.0, 0.0).astype(f32)

    hidden_final = None
    for layer in range(num_layers):
        w_ih_ref = layer_refs[3 * layer + 0]     # (2, D_in, 4H)
        w_hh_ref = layer_refs[3 * layer + 1]     # (2H, 4H)
        b_ref = layer_refs[3 * layer + 2]        # (2, 1, 4H)

        # ---- hoisted input projections (+ fused bias): 1 batched matmul per direction ----
        gx_f = jnp.dot(x_seq, w_ih_ref[0], preferred_element_type=f32) + b_ref[0]  # (TB, 4H)
        gx_b = jnp.dot(x_seq, w_ih_ref[1], preferred_element_type=f32) + b_ref[1]  # (TB, 4H)
        w_hh = w_hh_ref[...]                                                        # (2H, 4H)

        # state layout: sublane-stacked, top B rows = forward dir, bottom B rows = backward dir
        h_pad = jnp.zeros((2 * B, 2 * H), f32)   # [[h_f, 0], [0, h_b]]
        c = jnp.zeros((2 * B, H), f32)           # [c_f ; c_b]
        h_last = None

        # single fused time loop over both directions (T is small & static -> fully unrolled)
        for s in range(T):
            # only h @ W_hh remains on the serialized per-step chain (1 MXU push / step / layer)
            rec = jnp.dot(h_pad, w_hh, preferred_element_type=f32)          # (2B, 4H)
            gx_t = jnp.concatenate(
                [gx_f[s * B:(s + 1) * B, :],                  # forward reads time s
                 gx_b[(T - 1 - s) * B:(T - s) * B, :]],       # backward reads time T-1-s
                axis=0)                                        # (2B, 4H)
            gates = rec + gx_t
            # one vreg-wide EUP pass for both directions
            sg = jax.nn.sigmoid(gates)
            tg = jnp.tanh(gates)
            i = sg[:, 0 * H:1 * H]
            f = sg[:, 1 * H:2 * H]
            g = tg[:, 2 * H:3 * H]
            o = sg[:, 3 * H:4 * H]
            c = f * c + i * g
            h_new = o * jnp.tanh(c)                                          # (2B, H)
            # rebuild the zero-padded operand for the next recurrent matmul
            h_pad = jnp.concatenate([h_new, h_new], axis=1) * dir_mask       # (2B, 2H)

            if layer + 1 < num_layers:
                # stage per-timestep outputs (off the recurrent chain) for the
                # next layer's batched input projection: row-block t gets
                # [y_fwd(t) | y_bwd(t)] along lanes.
                y_ref[s * B:(s + 1) * B, 0:H] = h_new[0:B, :]
                y_ref[(T - 1 - s) * B:(T - s) * B, H:2 * H] = h_new[B:2 * B, :]
            h_last = h_new

        if layer + 1 < num_layers:
            x_seq = y_ref[...]                                               # (TB, 2H)
            # inter-layer dropout of nn.LSTM is identity at inference
        else:
            # torch.cat((hidden[-2], hidden[-1]), dim=1): fwd final (after t=T-1),
            # bwd final (after t=0) of the last layer.
            hidden_final = jnp.concatenate([h_last[0:B, :], h_last[B:2 * B, :]], axis=1)  # (B, 2H)

    # dropout(hidden) identity at inference; linear head
    out_ref[...] = (
        jnp.dot(hidden_final, lin_w_ref[...], preferred_element_type=f32)
        + lin_b_ref[...]
    )


# ---------------- wrapper ----------------
@jax.jit
def textrnn_forward(params, text):
    """text: (T, B) int32 token ids -> logits (B, OUT_SIZE)."""
    assert BIDIRECTIONAL, "fused kernel is specialized for the bidirectional configuration"
    T, B = text.shape
    E = EMBEDDING_SIZE
    H = HIDDEN_SIZE

    ids = text.reshape(T * B, 1).astype(jnp.int32)      # row t*B + b == text[t, b]

    operands = [ids, params["embedding"]]
    in_specs = [
        pl.BlockSpec((T * B, 1), lambda i: (0, 0)),
        pl.BlockSpec((VOCAB_PAD, E), lambda i: (0, 0)),
    ]
    for layer in range(NUM_LAYERS):
        lp = params["lstm"][layer]
        d_in = E if layer == 0 else 2 * H
        operands += [lp["w_ih_t"], lp["w_hh_cat"], lp["bias"]]
        in_specs += [
            pl.BlockSpec((2, d_in, 4 * H), lambda i: (0, 0, 0)),
            pl.BlockSpec((2 * H, 4 * H), lambda i: (0, 0)),
            pl.BlockSpec((2, 1, 4 * H), lambda i: (0, 0, 0)),
        ]
    operands += [params["linear_w_t"], params["linear_b"]]
    in_specs += [
        pl.BlockSpec((2 * H, OUT_SIZE), lambda i: (0, 0)),
        pl.BlockSpec((1, OUT_SIZE), lambda i: (0, 0)),
    ]

    return pl.pallas_call(
        _textrnn_kernel,
        out_shape=jax.ShapeDtypeStruct((B, OUT_SIZE), jnp.float32),
        grid_spec=pltpu.PrefetchScalarGridSpec(
            num_scalar_prefetch=0,
            grid=(1,),
            in_specs=in_specs,
            out_specs=pl.BlockSpec((B, OUT_SIZE), lambda i: (0, 0)),
            scratch_shapes=[pltpu.VMEM((T * B, 2 * H), jnp.float32)],
        ),
        compiler_params=pltpu.CompilerParams(
            dimension_semantics=("arbitrary",)),
    )(*operands)


# ---------------- parameter construction (deterministic) ----------------
def init_params(key):
    params = {}
    k = 1.0 / jnp.sqrt(jnp.float32(HIDDEN_SIZE))

    key, sub = jax.random.split(key)
    # nn.Embedding default init: N(0, 1); zero-padded to a lane-aligned vocab
    # so the in-kernel one-hot matmul uses nicely tiled operands.
    emb = jax.random.normal(sub, (VOCAB_SIZE, EMBEDDING_SIZE), jnp.float32)
    emb_pad = jnp.zeros((VOCAB_PAD, EMBEDDING_SIZE), jnp.float32).at[:VOCAB_SIZE].set(emb)
    params["embedding"] = emb_pad

    num_dirs = 2 if BIDIRECTIONAL else 1
    lstm = []
    for layer in range(NUM_LAYERS):
        d_in = EMBEDDING_SIZE if layer == 0 else HIDDEN_SIZE * num_dirs
        wih_list, whh_list, b_list = [], [], []
        for _d in range(num_dirs):
            key, k1, k2, k3, k4 = jax.random.split(key, 5)
            w_ih = jax.random.uniform(
                k1, (4 * HIDDEN_SIZE, d_in), jnp.float32, -k, k)
            w_hh = jax.random.uniform(
                k2, (4 * HIDDEN_SIZE, HIDDEN_SIZE), jnp.float32, -k, k)
            b_ih = jax.random.uniform(
                k3, (4 * HIDDEN_SIZE,), jnp.float32, -k, k)
            b_hh = jax.random.uniform(
                k4, (4 * HIDDEN_SIZE,), jnp.float32, -k, k)
            wih_list.append(w_ih.T)                 # (d_in, 4H)
            whh_list.append(w_hh.T)                 # (H, 4H)
            b_list.append((b_ih + b_hh)[None, :])   # (1, 4H)
        lstm.append({
            "w_ih_t": jnp.stack(wih_list),                   # (2, d_in, 4H)
            "w_hh_cat": jnp.concatenate(whh_list, axis=0),   # (2H, 4H) = [Wf.T ; Wb.T]
            "bias": jnp.stack(b_list),                       # (2, 1, 4H)
        })
    params["lstm"] = lstm

    d_lin_in = HIDDEN_SIZE * num_dirs
    k_lin = 1.0 / jnp.sqrt(jnp.float32(d_lin_in))
    key, k1, k2 = jax.random.split(key, 3)
    w = jax.random.uniform(k1, (OUT_SIZE, d_lin_in), jnp.float32, -k_lin, k_lin)
    b = jax.random.uniform(k2, (OUT_SIZE,), jnp.float32, -k_lin, k_lin)
    params["linear_w_t"] = w.T                      # (2H, OUT)
    params["linear_b"] = b[None, :]                 # (1, OUT)
    return params


if __name__ == "__main__":
    key = jax.random.PRNGKey(0)
    key, pkey, tkey = jax.random.split(key, 3)

    params = init_params(pkey)
    text = jax.random.randint(tkey, (SEQ_LEN, BATCH), 0, VOCAB_SIZE, dtype=jnp.int32)

    result = textrnn_forward(params, text)
    jax.block_until_ready(result)

    assert result.shape == (BATCH, OUT_SIZE)
    assert result.dtype == jnp.float32
    print("KERNEL_OK")
</pallas_src>

<mosaic_0001>
module attributes {stable_mosaic.version = 11 : i64} {
  func.func @_textrnn_kernel(%arg0: i32, %arg1: memref<16x1xi32, #tpu.memory_space<vmem>>, %arg2: memref<128x16xf32, #tpu.memory_space<vmem>>, %arg3: memref<2x16x128xf32, #tpu.memory_space<vmem>>, %arg4: memref<64x128xf32, #tpu.memory_space<vmem>>, %arg5: memref<2x1x128xf32, #tpu.memory_space<vmem>>, %arg6: memref<2x64x128xf32, #tpu.memory_space<vmem>>, %arg7: memref<64x128xf32, #tpu.memory_space<vmem>>, %arg8: memref<2x1x128xf32, #tpu.memory_space<vmem>>, %arg9: memref<64x4xf32, #tpu.memory_space<vmem>>, %arg10: memref<1x4xf32, #tpu.memory_space<vmem>>, %arg11: memref<2x4xf32, #tpu.memory_space<vmem>>, %arg12: memref<16x64xf32, #tpu.memory_space<vmem>>) attributes {dimension_semantics = [#tpu.dimension_semantics<arbitrary>], iteration_bounds = array<i64: 1>, scalar_prefetch = 0 : i64, scratch_operands = 1 : i64, tpu.core_type = #tpu.core_type<tc>, window_params = [{pipeline_mode = #tpu.pipeline_mode<synchronous>, transform_indices = @transform_0, window_bounds = array<i64: 16, 1>}, {pipeline_mode = #tpu.pipeline_mode<synchronous>, transform_indices = @transform_1, window_bounds = array<i64: 128, 16>}, {pipeline_mode = #tpu.pipeline_mode<synchronous>, transform_indices = @transform_2, window_bounds = array<i64: 2, 16, 128>}, {pipeline_mode = #tpu.pipeline_mode<synchronous>, transform_indices = @transform_3, window_bounds = array<i64: 64, 128>}, {pipeline_mode = #tpu.pipeline_mode<synchronous>, transform_indices = @transform_4, window_bounds = array<i64: 2, 1, 128>}, {pipeline_mode = #tpu.pipeline_mode<synchronous>, transform_indices = @transform_5, window_bounds = array<i64: 2, 64, 128>}, {pipeline_mode = #tpu.pipeline_mode<synchronous>, transform_indices = @transform_6, window_bounds = array<i64: 64, 128>}, {pipeline_mode = #tpu.pipeline_mode<synchronous>, transform_indices = @transform_7, window_bounds = array<i64: 2, 1, 128>}, {pipeline_mode = #tpu.pipeline_mode<synchronous>, transform_indices = @transform_8, window_bounds = array<i64: 64, 4>}, {pipeline_mode = #tpu.pipeline_mode<synchronous>, transform_indices = @transform_9, window_bounds = array<i64: 1, 4>}, {pipeline_mode = #tpu.pipeline_mode<synchronous>, transform_indices = @transform_10, window_bounds = array<i64: 2, 4>}]} {
    %c0 = arith.constant 0 : index
    %c0_0 = arith.constant 0 : index
    %0 = vector.load %arg1[%c0, %c0_0] : memref<16x1xi32, #tpu.memory_space<vmem>>, vector<16x1xi32>
    %1 = tpu.iota {dimensions = array<i32: 1>} : vector<16x128xi32>
    %2 = vector.broadcast %0 : vector<16x1xi32> to vector<16x128xi32>
    %3 = arith.cmpi eq, %1, %2 : vector<16x128xi32>
    %cst = arith.constant 1.000000e+00 : f32
    %cst_1 = arith.constant 0.000000e+00 : f32
    %4 = vector.broadcast %cst : f32 to vector<16x128xf32>
    %5 = vector.broadcast %cst_1 : f32 to vector<16x128xf32>
    %6 = arith.select %3, %4, %5 : vector<16x128xi1>, vector<16x128xf32>
    %c0_2 = arith.constant 0 : index
    %c0_3 = arith.constant 0 : index
    %7 = vector.load %arg2[%c0_2, %c0_3] : memref<128x16xf32, #tpu.memory_space<vmem>>, vector<128x16xf32>
    %cst_4 = arith.constant dense<0.000000e+00> : vector<16x16xf32>
    %8 = tpu.matmul %6, %7, %cst_4 {dimension_numbers = #tpu.dot_dimension_numbers<[1], [0], [0], [1], [0, 0, 1, 1], [], []>} : vector<16x128xf32>, vector<128x16xf32>, vector<16x16xf32> -> vector<16x16xf32>
    %9 = tpu.iota {dimensions = array<i32: 0>} : vector<4x64xi32>
    %10 = tpu.iota {dimensions = array<i32: 1>} : vector<4x64xi32>
    %c2_i32 = arith.constant 2 : i32
    %11 = vector.broadcast %c2_i32 : i32 to vector<4x64xi32>
    %12 = arith.cmpi slt, %9, %11 : vector<4x64xi32>
    %c32_i32 = arith.constant 32 : i32
    %13 = vector.broadcast %c32_i32 : i32 to vector<4x64xi32>
    %14 = arith.cmpi slt, %10, %13 : vector<4x64xi32>
    %15 = arith.xori %12, %14 : vector<4x64xi1>
    %cst_5 = arith.constant dense<true> : vector<4x64xi1>
    %16 = arith.xori %15, %cst_5 : vector<4x64xi1>
    %cst_6 = arith.constant 1.000000e+00 : f32
    %cst_7 = arith.constant 0.000000e+00 : f32
    %17 = vector.broadcast %cst_6 : f32 to vector<4x64xf32>
    %18 = vector.broadcast %cst_7 : f32 to vector<4x64xf32>
    %19 = arith.select %16, %17, %18 : vector<4x64xi1>, vector<4x64xf32>
    %c0_8 = arith.constant 0 : index
    %c0_9 = arith.constant 0 : index
    %c0_10 = arith.constant 0 : index
    %20 = vector.load %arg3[%c0_8, %c0_9, %c0_10] : memref<2x16x128xf32, #tpu.memory_space<vmem>>, vector<1x16x128xf32>
    %21 = vector.shape_cast %20 : vector<1x16x128xf32> to vector<16x128xf32>
    %cst_11 = arith.constant dense<0.000000e+00> : vector<16x128xf32>
    %22 = tpu.matmul %8, %21, %cst_11 {dimension_numbers = #tpu.dot_dimension_numbers<[1], [0], [0], [1], [0, 0, 1, 1], [], []>} : vector<16x16xf32>, vector<16x128xf32>, vector<16x128xf32> -> vector<16x128xf32>
    %c0_12 = arith.constant 0 : index
    %c0_13 = arith.constant 0 : index
    %c0_14 = arith.constant 0 : index
    %23 = vector.load %arg5[%c0_12, %c0_13, %c0_14] : memref<2x1x128xf32, #tpu.memory_space<vmem>>, vector<1x1x128xf32>
    %24 = vector.shape_cast %23 : vector<1x1x128xf32> to vector<1x128xf32>
    %25 = vector.broadcast %24 : vector<1x128xf32> to vector<16x128xf32>
    %26 = arith.addf %22, %25 : vector<16x128xf32>
    %c1 = arith.constant 1 : index
    %c0_15 = arith.constant 0 : index
    %c0_16 = arith.constant 0 : index
    %27 = vector.load %arg3[%c1, %c0_15, %c0_16] : memref<2x16x128xf32, #tpu.memory_space<vmem>>, vector<1x16x128xf32>
    %28 = vector.shape_cast %27 : vector<1x16x128xf32> to vector<16x128xf32>
    %cst_17 = arith.constant dense<0.000000e+00> : vector<16x128xf32>
    %29 = tpu.matmul %8, %28, %cst_17 {dimension_numbers = #tpu.dot_dimension_numbers<[1], [0], [0], [1], [0, 0, 1, 1], [], []>} : vector<16x16xf32>, vector<16x128xf32>, vector<16x128xf32> -> vector<16x128xf32>
    %c1_18 = arith.constant 1 : index
    %c0_19 = arith.constant 0 : index
    %c0_20 = arith.constant 0 : index
    %30 = vector.load %arg5[%c1_18, %c0_19, %c0_20] : memref<2x1x128xf32, #tpu.memory_space<vmem>>, vector<1x1x128xf32>
    %31 = vector.shape_cast %30 : vector<1x1x128xf32> to vector<1x128xf32>
    %32 = vector.broadcast %31 : vector<1x128xf32> to vector<16x128xf32>
    %33 = arith.addf %29, %32 : vector<16x128xf32>
    %c0_21 = arith.constant 0 : index
    %c0_22 = arith.constant 0 : index
    %34 = vector.load %arg4[%c0_21, %c0_22] : memref<64x128xf32, #tpu.memory_space<vmem>>, vector<64x128xf32>
    %cst_23 = arith.constant 0.000000e+00 : f32
    %35 = vector.broadcast %cst_23 : f32 to vector<4x64xf32>
    %cst_24 = arith.constant 0.000000e+00 : f32
    %36 = vector.broadcast %cst_24 : f32 to vector<4x32xf32>
    %cst_25 = arith.constant dense<0.000000e+00> : vector<4x128xf32>
    %37 = tpu.matmul %35, %34, %cst_25 {dimension_numbers = #tpu.dot_dimension_numbers<[1], [0], [0], [1], [0, 0, 1, 1], [], []>} : vector<4x64xf32>, vector<64x128xf32>, vector<4x128xf32> -> vector<4x128xf32>
    %38 = vector.extract_strided_slice %26 {offsets = [0, 0], sizes = [2, 128], strides = [1, 1]} : vector<16x128xf32> to vector<2x128xf32>
    %39 = vector.extract_strided_slice %33 {offsets = [14, 0], sizes = [2, 128], strides = [1, 1]} : vector<16x128xf32> to vector<2x128xf32>
    %40 = tpu.concatenate %38, %39 in 0 : vector<2x128xf32>, vector<2x128xf32> -> vector<4x128xf32>
    %41 = arith.addf %37, %40 : vector<4x128xf32>
    %42 = arith.negf %41 : vector<4x128xf32>
    %43 = math.exp %42 : vector<4x128xf32>
    %cst_26 = arith.constant 1.000000e+00 : f32
    %44 = vector.broadcast %cst_26 : f32 to vector<4x128xf32>
    %45 = arith.addf %44, %43 : vector<4x128xf32>
    %46 = arith.divf %44, %45 : vector<4x128xf32>
    %47 = math.tanh %41 : vector<4x128xf32>
    %48 = vector.extract_strided_slice %46 {offsets = [0, 0], sizes = [4, 32], strides = [1, 1]} : vector<4x128xf32> to vector<4x32xf32>
    %49 = vector.extract_strided_slice %46 {offsets = [0, 32], sizes = [4, 32], strides = [1, 1]} : vector<4x128xf32> to vector<4x32xf32>
    %50 = vector.extract_strided_slice %47 {offsets = [0, 64], sizes = [4, 32], strides = [1, 1]} : vector<4x128xf32> to vector<4x32xf32>
    %51 = vector.extract_strided_slice %46 {offsets = [0, 96], sizes = [4, 32], strides = [1, 1]} : vector<4x128xf32> to vector<4x32xf32>
    %52 = arith.mulf %49, %36 : vector<4x32xf32>
    %53 = arith.mulf %48, %50 : vector<4x32xf32>
    %54 = arith.addf %52, %53 : vector<4x32xf32>
    %55 = math.tanh %54 : vector<4x32xf32>
    %56 = arith.mulf %51, %55 : vector<4x32xf32>
    %57 = tpu.concatenate %56, %56 in 1 : vector<4x32xf32>, vector<4x32xf32> -> vector<4x64xf32>
    %58 = arith.mulf %57, %19 : vector<4x64xf32>
    %59 = vector.extract_strided_slice %56 {offsets = [0, 0], sizes = [2, 32], strides = [1, 1]} : vector<4x32xf32> to vector<2x32xf32>
    %c0_27 = arith.constant 0 : index
    %c0_28 = arith.constant 0 : index
    %60 = vector.load %arg12[%c0_27, %c0_28] : memref<16x64xf32, #tpu.memory_space<vmem>>, vector<2x32xf32>
    tpu.vector_store %arg12[%c0_27, %c0_28], %59 {strides = array<i32>} : memref<16x64xf32, #tpu.memory_space<vmem>>, vector<2x32xf32>,
    %61 = vector.extract_strided_slice %56 {offsets = [2, 0], sizes = [2, 32], strides = [1, 1]} : vector<4x32xf32> to vector<2x32xf32>
    %c14 = arith.constant 14 : index
    %c32 = arith.constant 32 : index
    %62 = vector.load %arg12[%c14, %c32] : memref<16x64xf32, #tpu.memory_space<vmem>>, vector<2x32xf32>
    tpu.vector_store %arg12[%c14, %c32], %61 {strides = array<i32>} : memref<16x64xf32, #tpu.memory_space<vmem>>, vector<2x32xf32>,
    %cst_29 = arith.constant dense<0.000000e+00> : vector<4x128xf32>
    %63 = tpu.matmul %58, %34, %cst_29 {dimension_numbers = #tpu.dot_dimension_numbers<[1], [0], [0], [1], [0, 0, 1, 1], [], []>} : vector<4x64xf32>, vector<64x128xf32>, vector<4x128xf32> -> vector<4x128xf32>
    %64 = vector.extract_strided_slice %26 {offsets = [2, 0], sizes = [2, 128], strides = [1, 1]} : vector<16x128xf32> to vector<2x128xf32>
    %65 = vector.extract_strided_slice %33 {offsets = [12, 0], sizes = [2, 128], strides = [1, 1]} : vector<16x128xf32> to vector<2x128xf32>
    %66 = tpu.concatenate %64, %65 in 0 : vector<2x128xf32>, vector<2x128xf32> -> vector<4x128xf32>
    %67 = arith.addf %63, %66 : vector<4x128xf32>
    %68 = arith.negf %67 : vector<4x128xf32>
    %69 = math.exp %68 : vector<4x128xf32>
    %cst_30 = arith.constant 1.000000e+00 : f32
    %70 = vector.broadcast %cst_30 : f32 to vector<4x128xf32>
    %71 = arith.addf %70, %69 : vector<4x128xf32>
    %72 = arith.divf %70, %71 : vector<4x128xf32>
    %73 = math.tanh %67 : vector<4x128xf32>
    %74 = vector.extract_strided_slice %72 {offsets = [0, 0], sizes = [4, 32], strides = [1, 1]} : vector<4x128xf32> to vector<4x32xf32>
    %75 = vector.extract_strided_slice %72 {offsets = [0, 32], sizes = [4, 32], strides = [1, 1]} : vector<4x128xf32> to vector<4x32xf32>
    %76 = vector.extract_strided_slice %73 {offsets = [0, 64], sizes = [4, 32], strides = [1, 1]} : vector<4x128xf32> to vector<4x32xf32>
    %77 = vector.extract_strided_slice %72 {offsets = [0, 96], sizes = [4, 32], strides = [1, 1]} : vector<4x128xf32> to vector<4x32xf32>
    %78 = arith.mulf %75, %54 : vector<4x32xf32>
    %79 = arith.mulf %74, %76 : vector<4x32xf32>
    %80 = arith.addf %78, %79 : vector<4x32xf32>
    %81 = math.tanh %80 : vector<4x32xf32>
    %82 = arith.mulf %77, %81 : vector<4x32xf32>
    %83 = tpu.concatenate %82, %82 in 1 : vector<4x32xf32>, vector<4x32xf32> -> vector<4x64xf32>
    %84 = arith.mulf %83, %19 : vector<4x64xf32>
    %85 = vector.extract_strided_slice %82 {offsets = [0, 0], sizes = [2, 32], strides = [1, 1]} : vector<4x32xf32> to vector<2x32xf32>
    %c2 = arith.constant 2 : index
    %c0_31 = arith.constant 0 : index
    %86 = vector.load %arg12[%c2, %c0_31] : memref<16x64xf32, #tpu.memory_space<vmem>>, vector<2x32xf32>
    tpu.vector_store %arg12[%c2, %c0_31], %85 {strides = array<i32>} : memref<16x64xf32, #tpu.memory_space<vmem>>, vector<2x32xf32>,
    %87 = vector.extract_strided_slice %82 {offsets = [2, 0], sizes = [2, 32], strides = [1, 1]} : vector<4x32xf32> to vector<2x32xf32>
    %c12 = arith.constant 12 : index
    %c32_32 = arith.constant 32 : index
    %88 = vector.load %arg12[%c12, %c32_32] : memref<16x64xf32, #tpu.memory_space<vmem>>, vector<2x32xf32>
    tpu.vector_store %arg12[%c12, %c32_32], %87 {strides = array<i32>} : memref<16x64xf32, #tpu.memory_space<vmem>>, vector<2x32xf32>,
    %cst_33 = arith.constant dense<0.000000e+00> : vector<4x128xf32>
    %89 = tpu.matmul %84, %34, %cst_33 {dimension_numbers = #tpu.dot_dimension_numbers<[1], [0], [0], [1], [0, 0, 1, 1], [], []>} : vector<4x64xf32>, vector<64x128xf32>, vector<4x128xf32> -> vector<4x128xf32>
    %90 = vector.extract_strided_slice %26 {offsets = [4, 0], sizes = [2, 128], strides = [1, 1]} : vector<16x128xf32> to vector<2x128xf32>
    %91 = vector.extract_strided_slice %33 {offsets = [10, 0], sizes = [2, 128], strides = [1, 1]} : vector<16x128xf32> to vector<2x128xf32>
    %92 = tpu.concatenate %90, %91 in 0 : vector<2x128xf32>, vector<2x128xf32> -> vector<4x128xf32>
    %93 = arith.addf %89, %92 : vector<4x128xf32>
    %94 = arith.negf %93 : vector<4x128xf32>
    %95 = math.exp %94 : vector<4x128xf32>
    %cst_34 = arith.constant 1.000000e+00 : f32
    %96 = vector.broadcast %cst_34 : f32 to vector<4x128xf32>
    %97 = arith.addf %96, %95 : vector<4x128xf32>
    %98 = arith.divf %96, %97 : vector<4x128xf32>
    %99 = math.tanh %93 : vector<4x128xf32>
    %100 = vector.extract_strided_slice %98 {offsets = [0, 0], sizes = [4, 32], strides = [1, 1]} : vector<4x128xf32> to vector<4x32xf32>
    %101 = vector.extract_strided_slice %98 {offsets = [0, 32], sizes = [4, 32], strides = [1, 1]} : vector<4x128xf32> to vector<4x32xf32>
    %102 = vector.extract_strided_slice %99 {offsets = [0, 64], sizes = [4, 32], strides = [1, 1]} : vector<4x128xf32> to vector<4x32xf32>
    %103 = vector.extract_strided_slice %98 {offsets = [0, 96], sizes = [4, 32], strides = [1, 1]} : vector<4x128xf32> to vector<4x32xf32>
    %104 = arith.mulf %101, %80 : vector<4x32xf32>
    %105 = arith.mulf %100, %102 : vector<4x32xf32>
    %106 = arith.addf %104, %105 : vector<4x32xf32>
    %107 = math.tanh %106 : vector<4x32xf32>
    %108 = arith.mulf %103, %107 : vector<4x32xf32>
    %109 = tpu.concatenate %108, %108 in 1 : vector<4x32xf32>, vector<4x32xf32> -> vector<4x64xf32>
    %110 = arith.mulf %109, %19 : vector<4x64xf32>
    %111 = vector.extract_strided_slice %108 {offsets = [0, 0], sizes = [2, 32], strides = [1, 1]} : vector<4x32xf32> to vector<2x32xf32>
    %c4 = arith.constant 4 : index
    %c0_35 = arith.constant 0 : index
    %112 = vector.load %arg12[%c4, %c0_35] : memref<16x64xf32, #tpu.memory_space<vmem>>, vector<2x32xf32>
    tpu.vector_store %arg12[%c4, %c0_35], %111 {strides = array<i32>} : memref<16x64xf32, #tpu.memory_space<vmem>>, vector<2x32xf32>,
    %113 = vector.extract_strided_slice %108 {offsets = [2, 0], sizes = [2, 32], strides = [1, 1]} : vector<4x32xf32> to vector<2x32xf32>
    %c10 = arith.constant 10 : index
    %c32_36 = arith.constant 32 : index
    %114 = vector.load %arg12[%c10, %c32_36] : memref<16x64xf32, #tpu.memory_space<vmem>>, vector<2x32xf32>
    tpu.vector_store %arg12[%c10, %c32_36], %113 {strides = array<i32>} : memref<16x64xf32, #tpu.memory_space<vmem>>, vector<2x32xf32>,
    %cst_37 = arith.constant dense<0.000000e+00> : vector<4x128xf32>
    %115 = tpu.matmul %110, %34, %cst_37 {dimension_numbers = #tpu.dot_dimension_numbers<[1], [0], [0], [1], [0, 0, 1, 1], [], []>} : vector<4x64xf32>, vector<64x128xf32>, vector<4x128xf32> -> vector<4x128xf32>
    %116 = vector.extract_strided_slice %26 {offsets = [6, 0], sizes = [2, 128], strides = [1, 1]} : vector<16x128xf32> to vector<2x128xf32>
    %117 = vector.extract_strided_slice %33 {offsets = [8, 0], sizes = [2, 128], strides = [1, 1]} : vector<16x128xf32> to vector<2x128xf32>
    %118 = tpu.concatenate %116, %117 in 0 : vector<2x128xf32>, vector<2x128xf32> -> vector<4x128xf32>
    %119 = arith.addf %115, %118 : vector<4x128xf32>
    %120 = arith.negf %119 : vector<4x128xf32>
    %121 = math.exp %120 : vector<4x128xf32>
    %cst_38 = arith.constant 1.000000e+00 : f32
    %122 = vector.broadcast %cst_38 : f32 to vector<4x128xf32>
    %123 = arith.addf %122, %121 : vector<4x128xf32>
    %124 = arith.divf %122, %123 : vector<4x128xf32>
    %125 = math.tanh %119 : vector<4x128xf32>
    %126 = vector.extract_strided_slice %124 {offsets = [0, 0], sizes = [4, 32], strides = [1, 1]} : vector<4x128xf32> to vector<4x32xf32>
    %127 = vector.extract_strided_slice %124 {offsets = [0, 32], sizes = [4, 32], strides = [1, 1]} : vector<4x128xf32> to vector<4x32xf32>
    %128 = vector.extract_strided_slice %125 {offsets = [0, 64], sizes = [4, 32], strides = [1, 1]} : vector<4x128xf32> to vector<4x32xf32>
    %129 = vector.extract_strided_slice %124 {offsets = [0, 96], sizes = [4, 32], strides = [1, 1]} : vector<4x128xf32> to vector<4x32xf32>
    %130 = arith.mulf %127, %106 : vector<4x32xf32>
    %131 = arith.mulf %126, %128 : vector<4x32xf32>
    %132 = arith.addf %130, %131 : vector<4x32xf32>
    %133 = math.tanh %132 : vector<4x32xf32>
    %134 = arith.mulf %129, %133 : vector<4x32xf32>
    %135 = tpu.concatenate %134, %134 in 1 : vector<4x32xf32>, vector<4x32xf32> -> vector<4x64xf32>
    %136 = arith.mulf %135, %19 : vector<4x64xf32>
    %137 = vector.extract_strided_slice %134 {offsets = [0, 0], sizes = [2, 32], strides = [1, 1]} : vector<4x32xf32> to vector<2x32xf32>
    %c6 = arith.constant 6 : index
    %c0_39 = arith.constant 0 : index
    %138 = vector.load %arg12[%c6, %c0_39] : memref<16x64xf32, #tpu.memory_space<vmem>>, vector<2x32xf32>
    tpu.vector_store %arg12[%c6, %c0_39], %137 {strides = array<i32>} : memref<16x64xf32, #tpu.memory_space<vmem>>, vector<2x32xf32>,
    %139 = vector.extract_strided_slice %134 {offsets = [2, 0], sizes = [2, 32], strides = [1, 1]} : vector<4x32xf32> to vector<2x32xf32>
    %c8 = arith.constant 8 : index
    %c32_40 = arith.constant 32 : index
    %140 = vector.load %arg12[%c8, %c32_40] : memref<16x64xf32, #tpu.memory_space<vmem>>, vector<2x32xf32>
    tpu.vector_store %arg12[%c8, %c32_40], %139 {strides = array<i32>} : memref<16x64xf32, #tpu.memory_space<vmem>>, vector<2x32xf32>,
    %cst_41 = arith.constant dense<0.000000e+00> : vector<4x128xf32>
    %141 = tpu.matmul %136, %34, %cst_41 {dimension_numbers = #tpu.dot_dimension_numbers<[1], [0], [0], [1], [0, 0, 1, 1], [], []>} : vector<4x64xf32>, vector<64x128xf32>, vector<4x128xf32> -> vector<4x128xf32>
    %142 = vector.extract_strided_slice %26 {offsets = [8, 0], sizes = [2, 128], strides = [1, 1]} : vector<16x128xf32> to vector<2x128xf32>
    %143 = vector.extract_strided_slice %33 {offsets = [6, 0], sizes = [2, 128], strides = [1, 1]} : vector<16x128xf32> to vector<2x128xf32>
    %144 = tpu.concatenate %142, %143 in 0 : vector<2x128xf32>, vector<2x128xf32> -> vector<4x128xf32>
    %145 = arith.addf %141, %144 : vector<4x128xf32>
    %146 = arith.negf %145 : vector<4x128xf32>
    %147 = math.exp %146 : vector<4x128xf32>
    %cst_42 = arith.constant 1.000000e+00 : f32
    %148 = vector.broadcast %cst_42 : f32 to vector<4x128xf32>
    %149 = arith.addf %148, %147 : vector<4x128xf32>
    %150 = arith.divf %148, %149 : vector<4x128xf32>
    %151 = math.tanh %145 : vector<4x128xf32>
    %152 = vector.extract_strided_slice %150 {offsets = [0, 0], sizes = [4, 32], strides = [1, 1]} : vector<4x128xf32> to vector<4x32xf32>
    %153 = vector.extract_strided_slice %150 {offsets = [0, 32], sizes = [4, 32], strides = [1, 1]} : vector<4x128xf32> to vector<4x32xf32>
    %154 = vector.extract_strided_slice %151 {offsets = [0, 64], sizes = [4, 32], strides = [1, 1]} : vector<4x128xf32> to vector<4x32xf32>
    %155 = vector.extract_strided_slice %150 {offsets = [0, 96], sizes = [4, 32], strides = [1, 1]} : vector<4x128xf32> to vector<4x32xf32>
    %156 = arith.mulf %153, %132 : vector<4x32xf32>
    %157 = arith.mulf %152, %154 : vector<4x32xf32>
    %158 = arith.addf %156, %157 : vector<4x32xf32>
    %159 = math.tanh %158 : vector<4x32xf32>
    %160 = arith.mulf %155, %159 : vector<4x32xf32>
    %161 = tpu.concatenate %160, %160 in 1 : vector<4x32xf32>, vector<4x32xf32> -> vector<4x64xf32>
    %162 = arith.mulf %161, %19 : vector<4x64xf32>
    %163 = vector.extract_strided_slice %160 {offsets = [0, 0], sizes = [2, 32], strides = [1, 1]} : vector<4x32xf32> to vector<2x32xf32>
    %c8_43 = arith.constant 8 : index
    %c0_44 = arith.constant 0 : index
    %164 = vector.load %arg12[%c8_43, %c0_44] : memref<16x64xf32, #tpu.memory_space<vmem>>, vector<2x32xf32>
    tpu.vector_store %arg12[%c8_43, %c0_44], %163 {strides = array<i32>} : memref<16x64xf32, #tpu.memory_space<vmem>>, vector<2x32xf32>,
    %165 = vector.extract_strided_slice %160 {offsets = [2, 0], sizes = [2, 32], strides = [1, 1]} : vector<4x32xf32> to vector<2x32xf32>
    %c6_45 = arith.constant 6 : index
    %c32_46 = arith.constant 32 : index
    %166 = vector.load %arg12[%c6_45, %c32_46] : memref<16x64xf32, #tpu.memory_space<vmem>>, vector<2x32xf32>
    tpu.vector_store %arg12[%c6_45, %c32_46], %165 {strides = array<i32>} : memref<16x64xf32, #tpu.memory_space<vmem>>, vector<2x32xf32>,
    %cst_47 = arith.constant dense<0.000000e+00> : vector<4x128xf32>
    %167 = tpu.matmul %162, %34, %cst_47 {dimension_numbers = #tpu.dot_dimension_numbers<[1], [0], [0], [1], [0, 0, 1, 1], [], []>} : vector<4x64xf32>, vector<64x128xf32>, vector<4x128xf32> -> vector<4x128xf32>
    %168 = vector.extract_strided_slice %26 {offsets = [10, 0], sizes = [2, 128], strides = [1, 1]} : vector<16x128xf32> to vector<2x128xf32>
    %169 = vector.extract_strided_slice %33 {offsets = [4, 0], sizes = [2, 128], strides = [1, 1]} : vector<16x128xf32> to vector<2x128xf32>
    %170 = tpu.concatenate %168, %169 in 0 : vector<2x128xf32>, vector<2x128xf32> -> vector<4x128xf32>
    %171 = arith.addf %167, %170 : vector<4x128xf32>
    %172 = arith.negf %171 : vector<4x128xf32>
    %173 = math.exp %172 : vector<4x128xf32>
    %cst_48 = arith.constant 1.000000e+00 : f32
    %174 = vector.broadcast %cst_48 : f32 to vector<4x128xf32>
    %175 = arith.addf %174, %173 : vector<4x128xf32>
    %176 = arith.divf %174, %175 : vector<4x128xf32>
    %177 = math.tanh %171 : vector<4x128xf32>
    %178 = vector.extract_strided_slice %176 {offsets = [0, 0], sizes = [4, 32], strides = [1, 1]} : vector<4x128xf32> to vector<4x32xf32>
    %179 = vector.extract_strided_slice %176 {offsets = [0, 32], sizes = [4, 32], strides = [1, 1]} : vector<4x128xf32> to vector<4x32xf32>
    %180 = vector.extract_strided_slice %177 {offsets = [0, 64], sizes = [4, 32], strides = [1, 1]} : vector<4x128xf32> to vector<4x32xf32>
    %181 = vector.extract_strided_slice %176 {offsets = [0, 96], sizes = [4, 32], strides = [1, 1]} : vector<4x128xf32> to vector<4x32xf32>
    %182 = arith.mulf %179, %158 : vector<4x32xf32>
    %183 = arith.mulf %178, %180 : vector<4x32xf32>
    %184 = arith.addf %182, %183 : vector<4x32xf32>
    %185 = math.tanh %184 : vector<4x32xf32>
    %186 = arith.mulf %181, %185 : vector<4x32xf32>
    %187 = tpu.concatenate %186, %186 in 1 : vector<4x32xf32>, vector<4x32xf32> -> vector<4x64xf32>
    %188 = arith.mulf %187, %19 : vector<4x64xf32>
    %189 = vector.extract_strided_slice %186 {offsets = [0, 0], sizes = [2, 32], strides = [1, 1]} : vector<4x32xf32> to vector<2x32xf32>
    %c10_49 = arith.constant 10 : index
    %c0_50 = arith.constant 0 : index
    %190 = vector.load %arg12[%c10_49, %c0_50] : memref<16x64xf32, #tpu.memory_space<vmem>>, vector<2x32xf32>
    tpu.vector_store %arg12[%c10_49, %c0_50], %189 {strides = array<i32>} : memref<16x64xf32, #tpu.memory_space<vmem>>, vector<2x32xf32>,
    %191 = vector.extract_strided_slice %186 {offsets = [2, 0], sizes = [2, 32], strides = [1, 1]} : vector<4x32xf32> to vector<2x32xf32>
    %c4_51 = arith.constant 4 : index
    %c32_52 = arith.constant 32 : index
    %192 = vector.load %arg12[%c4_51, %c32_52] : memref<16x64xf32, #tpu.memory_space<vmem>>, vector<2x32xf32>
    tpu.vector_store %arg12[%c4_51, %c32_52], %191 {strides = array<i32>} : memref<16x64xf32, #tpu.memory_space<vmem>>, vector<2x32xf32>,
    %cst_53 = arith.constant dense<0.000000e+00> : vector<4x128xf32>
    %193 = tpu.matmul %188, %34, %cst_53 {dimension_numbers = #tpu.dot_dimension_numbers<[1], [0], [0], [1], [0, 0, 1, 1], [], []>} : vector<4x64xf32>, vector<64x128xf32>, vector<4x128xf32> -> vector<4x128xf32>
    %194 = vector.extract_strided_slice %26 {offsets = [12, 0], sizes = [2, 128], strides = [1, 1]} : vector<16x128xf32> to vector<2x128xf32>
    %195 = vector.extract_strided_slice %33 {offsets = [2, 0], sizes = [2, 128], strides = [1, 1]} : vector<16x128xf32> to vector<2x128xf32>
    %196 = tpu.concatenate %194, %195 in 0 : vector<2x128xf32>, vector<2x128xf32> -> vector<4x128xf32>
    %197 = arith.addf %193, %196 : vector<4x128xf32>
    %198 = arith.negf %197 : vector<4x128xf32>
    %199 = math.exp %198 : vector<4x128xf32>
    %cst_54 = arith.constant 1.000000e+00 : f32
    %200 = vector.broadcast %cst_54 : f32 to vector<4x128xf32>
    %201 = arith.addf %200, %199 : vector<4x128xf32>
    %202 = arith.divf %200, %201 : vector<4x128xf32>
    %203 = math.tanh %197 : vector<4x128xf32>
    %204 = vector.extract_strided_slice %202 {offsets = [0, 0], sizes = [4, 32], strides = [1, 1]} : vector<4x128xf32> to vector<4x32xf32>
    %205 = vector.extract_strided_slice %202 {offsets = [0, 32], sizes = [4, 32], strides = [1, 1]} : vector<4x128xf32> to vector<4x32xf32>
    %206 = vector.extract_strided_slice %203 {offsets = [0, 64], sizes = [4, 32], strides = [1, 1]} : vector<4x128xf32> to vector<4x32xf32>
    %207 = vector.extract_strided_slice %202 {offsets = [0, 96], sizes = [4, 32], strides = [1, 1]} : vector<4x128xf32> to vector<4x32xf32>
    %208 = arith.mulf %205, %184 : vector<4x32xf32>
    %209 = arith.mulf %204, %206 : vector<4x32xf32>
    %210 = arith.addf %208, %209 : vector<4x32xf32>
    %211 = math.tanh %210 : vector<4x32xf32>
    %212 = arith.mulf %207, %211 : vector<4x32xf32>
    %213 = tpu.concatenate %212, %212 in 1 : vector<4x32xf32>, vector<4x32xf32> -> vector<4x64xf32>
    %214 = arith.mulf %213, %19 : vector<4x64xf32>
    %215 = vector.extract_strided_slice %212 {offsets = [0, 0], sizes = [2, 32], strides = [1, 1]} : vector<4x32xf32> to vector<2x32xf32>
    %c12_55 = arith.constant 12 : index
    %c0_56 = arith.constant 0 : index
    %216 = vector.load %arg12[%c12_55, %c0_56] : memref<16x64xf32, #tpu.memory_space<vmem>>, vector<2x32xf32>
    tpu.vector_store %arg12[%c12_55, %c0_56], %215 {strides = array<i32>} : memref<16x64xf32, #tpu.memory_space<vmem>>, vector<2x32xf32>,
    %217 = vector.extract_strided_slice %212 {offsets = [2, 0], sizes = [2, 32], strides = [1, 1]} : vector<4x32xf32> to vector<2x32xf32>
    %c2_57 = arith.constant 2 : index
    %c32_58 = arith.constant 32 : index
    %218 = vector.load %arg12[%c2_57, %c32_58] : memref<16x64xf32, #tpu.memory_space<vmem>>, vector<2x32xf32>
    tpu.vector_store %arg12[%c2_57, %c32_58], %217 {strides = array<i32>} : memref<16x64xf32, #tpu.memory_space<vmem>>, vector<2x32xf32>,
    %cst_59 = arith.constant dense<0.000000e+00> : vector<4x128xf32>
    %219 = tpu.matmul %214, %34, %cst_59 {dimension_numbers = #tpu.dot_dimension_numbers<[1], [0], [0], [1], [0, 0, 1, 1], [], []>} : vector<4x64xf32>, vector<64x128xf32>, vector<4x128xf32> -> vector<4x128xf32>
    %220 = vector.extract_strided_slice %26 {offsets = [14, 0], sizes = [2, 128], strides = [1, 1]} : vector<16x128xf32> to vector<2x128xf32>
    %221 = vector.extract_strided_slice %33 {offsets = [0, 0], sizes = [2, 128], strides = [1, 1]} : vector<16x128xf32> to vector<2x128xf32>
    %222 = tpu.concatenate %220, %221 in 0 : vector<2x128xf32>, vector<2x128xf32> -> vector<4x128xf32>
    %223 = arith.addf %219, %222 : vector<4x128xf32>
    %224 = arith.negf %223 : vector<4x128xf32>
    %225 = math.exp %224 : vector<4x128xf32>
    %cst_60 = arith.constant 1.000000e+00 : f32
    %226 = vector.broadcast %cst_60 : f32 to vector<4x128xf32>
    %227 = arith.addf %226, %225 : vector<4x128xf32>
    %228 = arith.divf %226, %227 : vector<4x128xf32>
    %229 = math.tanh %223 : vector<4x128xf32>
    %230 = vector.extract_strided_slice %228 {offsets = [0, 0], sizes = [4, 32], strides = [1, 1]} : vector<4x128xf32> to vector<4x32xf32>
    %231 = vector.extract_strided_slice %228 {offsets = [0, 32], sizes = [4, 32], strides = [1, 1]} : vector<4x128xf32> to vector<4x32xf32>
    %232 = vector.extract_strided_slice %229 {offsets = [0, 64], sizes = [4, 32], strides = [1, 1]} : vector<4x128xf32> to vector<4x32xf32>
    %233 = vector.extract_strided_slice %228 {offsets = [0, 96], sizes = [4, 32], strides = [1, 1]} : vector<4x128xf32> to vector<4x32xf32>
    %234 = arith.mulf %231, %210 : vector<4x32xf32>
    %235 = arith.mulf %230, %232 : vector<4x32xf32>
    %236 = arith.addf %234, %235 : vector<4x32xf32>
    %237 = math.tanh %236 : vector<4x32xf32>
    %238 = arith.mulf %233, %237 : vector<4x32xf32>
    %239 = vector.extract_strided_slice %238 {offsets = [0, 0], sizes = [2, 32], strides = [1, 1]} : vector<4x32xf32> to vector<2x32xf32>
    %c14_61 = arith.constant 14 : index
    %c0_62 = arith.constant 0 : index
    %240 = vector.load %arg12[%c14_61, %c0_62] : memref<16x64xf32, #tpu.memory_space<vmem>>, vector<2x32xf32>
    tpu.vector_store %arg12[%c14_61, %c0_62], %239 {strides = array<i32>} : memref<16x64xf32, #tpu.memory_space<vmem>>, vector<2x32xf32>,
    %241 = vector.extract_strided_slice %238 {offsets = [2, 0], sizes = [2, 32], strides = [1, 1]} : vector<4x32xf32> to vector<2x32xf32>
    %c0_63 = arith.constant 0 : index
    %c32_64 = arith.constant 32 : index
    %242 = vector.load %arg12[%c0_63, %c32_64] : memref<16x64xf32, #tpu.memory_space<vmem>>, vector<2x32xf32>
    tpu.vector_store %arg12[%c0_63, %c32_64], %241 {strides = array<i32>} : memref<16x64xf32, #tpu.memory_space<vmem>>, vector<2x32xf32>,
    %c0_65 = arith.constant 0 : index
    %c0_66 = arith.constant 0 : index
    %243 = vector.load %arg12[%c0_65, %c0_66] : memref<16x64xf32, #tpu.memory_space<vmem>>, vector<16x64xf32>
    %c0_67 = arith.constant 0 : index
    %c0_68 = arith.constant 0 : index
    %c0_69 = arith.constant 0 : index
    %244 = vector.load %arg6[%c0_67, %c0_68, %c0_69] : memref<2x64x128xf32, #tpu.memory_space<vmem>>, vector<1x64x128xf32>
    %245 = vector.shape_cast %244 : vector<1x64x128xf32> to vector<64x128xf32>
    %cst_70 = arith.constant dense<0.000000e+00> : vector<16x128xf32>
    %246 = tpu.matmul %243, %245, %cst_70 {dimension_numbers = #tpu.dot_dimension_numbers<[1], [0], [0], [1], [0, 0, 1, 1], [], []>} : vector<16x64xf32>, vector<64x128xf32>, vector<16x128xf32> -> vector<16x128xf32>
    %c0_71 = arith.constant 0 : index
    %c0_72 = arith.constant 0 : index
    %c0_73 = arith.constant 0 : index
    %247 = vector.load %arg8[%c0_71, %c0_72, %c0_73] : memref<2x1x128xf32, #tpu.memory_space<vmem>>, vector<1x1x128xf32>
    %248 = vector.shape_cast %247 : vector<1x1x128xf32> to vector<1x128xf32>
    %249 = vector.broadcast %248 : vector<1x128xf32> to vector<16x128xf32>
    %250 = arith.addf %246, %249 : vector<16x128xf32>
    %c1_74 = arith.constant 1 : index
    %c0_75 = arith.constant 0 : index
    %c0_76 = arith.constant 0 : index
    %251 = vector.load %arg6[%c1_74, %c0_75, %c0_76] : memref<2x64x128xf32, #tpu.memory_space<vmem>>, vector<1x64x128xf32>
    %252 = vector.shape_cast %251 : vector<1x64x128xf32> to vector<64x128xf32>
    %cst_77 = arith.constant dense<0.000000e+00> : vector<16x128xf32>
    %253 = tpu.matmul %243, %252, %cst_77 {dimension_numbers = #tpu.dot_dimension_numbers<[1], [0], [0], [1], [0, 0, 1, 1], [], []>} : vector<16x64xf32>, vector<64x128xf32>, vector<16x128xf32> -> vector<16x128xf32>
    %c1_78 = arith.constant 1 : index
    %c0_79 = arith.constant 0 : index
    %c0_80 = arith.constant 0 : index
    %254 = vector.load %arg8[%c1_78, %c0_79, %c0_80] : memref<2x1x128xf32, #tpu.memory_space<vmem>>, vector<1x1x128xf32>
    %255 = vector.shape_cast %254 : vector<1x1x128xf32> to vector<1x128xf32>
    %256 = vector.broadcast %255 : vector<1x128xf32> to vector<16x128xf32>
    %257 = arith.addf %253, %256 : vector<16x128xf32>
    %c0_81 = arith.constant 0 : index
    %c0_82 = arith.constant 0 : index
    %258 = vector.load %arg7[%c0_81, %c0_82] : memref<64x128xf32, #tpu.memory_space<vmem>>, vector<64x128xf32>
    %cst_83 = arith.constant 0.000000e+00 : f32
    %259 = vector.broadcast %cst_83 : f32 to vector<4x64xf32>
    %cst_84 = arith.constant 0.000000e+00 : f32
    %260 = vector.broadcast %cst_84 : f32 to vector<4x32xf32>
    %cst_85 = arith.constant dense<0.000000e+00> : vector<4x128xf32>
    %261 = tpu.matmul %259, %258, %cst_85 {dimension_numbers = #tpu.dot_dimension_numbers<[1], [0], [0], [1], [0, 0, 1, 1], [], []>} : vector<4x64xf32>, vector<64x128xf32>, vector<4x128xf32> -> vector<4x128xf32>
    %262 = vector.extract_strided_slice %250 {offsets = [0, 0], sizes = [2, 128], strides = [1, 1]} : vector<16x128xf32> to vector<2x128xf32>
    %263 = vector.extract_strided_slice %257 {offsets = [14, 0], sizes = [2, 128], strides = [1, 1]} : vector<16x128xf32> to vector<2x128xf32>
    %264 = tpu.concatenate %262, %263 in 0 : vector<2x128xf32>, vector<2x128xf32> -> vector<4x128xf32>
    %265 = arith.addf %261, %264 : vector<4x128xf32>
    %266 = arith.negf %265 : vector<4x128xf32>
    %267 = math.exp %266 : vector<4x128xf32>
    %cst_86 = arith.constant 1.000000e+00 : f32
    %268 = vector.broadcast %cst_86 : f32 to vector<4x128xf32>
    %269 = arith.addf %268, %267 : vector<4x128xf32>
    %270 = arith.divf %268, %269 : vector<4x128xf32>
    %271 = math.tanh %265 : vector<4x128xf32>
    %272 = vector.extract_strided_slice %270 {offsets = [0, 0], sizes = [4, 32], strides = [1, 1]} : vector<4x128xf32> to vector<4x32xf32>
    %273 = vector.extract_strided_slice %270 {offsets = [0, 32], sizes = [4, 32], strides = [1, 1]} : vector<4x128xf32> to vector<4x32xf32>
    %274 = vector.extract_strided_slice %271 {offsets = [0, 64], sizes = [4, 32], strides = [1, 1]} : vector<4x128xf32> to vector<4x32xf32>
    %275 = vector.extract_strided_slice %270 {offsets = [0, 96], sizes = [4, 32], strides = [1, 1]} : vector<4x128xf32> to vector<4x32xf32>
    %276 = arith.mulf %273, %260 : vector<4x32xf32>
    %277 = arith.mulf %272, %274 : vector<4x32xf32>
    %278 = arith.addf %276, %277 : vector<4x32xf32>
    %279 = math.tanh %278 : vector<4x32xf32>
    %280 = arith.mulf %275, %279 : vector<4x32xf32>
    %281 = tpu.concatenate %280, %280 in 1 : vector<4x32xf32>, vector<4x32xf32> -> vector<4x64xf32>
    %282 = arith.mulf %281, %19 : vector<4x64xf32>
    %cst_87 = arith.constant dense<0.000000e+00> : vector<4x128xf32>
    %283 = tpu.matmul %282, %258, %cst_87 {dimension_numbers = #tpu.dot_dimension_numbers<[1], [0], [0], [1], [0, 0, 1, 1], [], []>} : vector<4x64xf32>, vector<64x128xf32>, vector<4x128xf32> -> vector<4x128xf32>
    %284 = vector.extract_strided_slice %250 {offsets = [2, 0], sizes = [2, 128], strides = [1, 1]} : vector<16x128xf32> to vector<2x128xf32>
    %285 = vector.extract_strided_slice %257 {offsets = [12, 0], sizes = [2, 128], strides = [1, 1]} : vector<16x128xf32> to vector<2x128xf32>
    %286 = tpu.concatenate %284, %285 in 0 : vector<2x128xf32>, vector<2x128xf32> -> vector<4x128xf32>
    %287 = arith.addf %283, %286 : vector<4x128xf32>
    %288 = arith.negf %287 : vector<4x128xf32>
    %289 = math.exp %288 : vector<4x128xf32>
    %cst_88 = arith.constant 1.000000e+00 : f32
    %290 = vector.broadcast %cst_88 : f32 to vector<4x128xf32>
    %291 = arith.addf %290, %289 : vector<4x128xf32>
    %292 = arith.divf %290, %291 : vector<4x128xf32>
    %293 = math.tanh %287 : vector<4x128xf32>
    %294 = vector.extract_strided_slice %292 {offsets = [0, 0], sizes = [4, 32], strides = [1, 1]} : vector<4x128xf32> to vector<4x32xf32>
    %295 = vector.extract_strided_slice %292 {offsets = [0, 32], sizes = [4, 32], strides = [1, 1]} : vector<4x128xf32> to vector<4x32xf32>
    %296 = vector.extract_strided_slice %293 {offsets = [0, 64], sizes = [4, 32], strides = [1, 1]} : vector<4x128xf32> to vector<4x32xf32>
    %297 = vector.extract_strided_slice %292 {offsets = [0, 96], sizes = [4, 32], strides = [1, 1]} : vector<4x128xf32> to vector<4x32xf32>
    %298 = arith.mulf %295, %278 : vector<4x32xf32>
    %299 = arith.mulf %294, %296 : vector<4x32xf32>
    %300 = arith.addf %298, %299 : vector<4x32xf32>
    %301 = math.tanh %300 : vector<4x32xf32>
    %302 = arith.mulf %297, %301 : vector<4x32xf32>
    %303 = tpu.concatenate %302, %302 in 1 : vector<4x32xf32>, vector<4x32xf32> -> vector<4x64xf32>
    %304 = arith.mulf %303, %19 : vector<4x64xf32>
    %cst_89 = arith.constant dense<0.000000e+00> : vector<4x128xf32>
    %305 = tpu.matmul %304, %258, %cst_89 {dimension_numbers = #tpu.dot_dimension_numbers<[1], [0], [0], [1], [0, 0, 1, 1], [], []>} : vector<4x64xf32>, vector<64x128xf32>, vector<4x128xf32> -> vector<4x128xf32>
    %306 = vector.extract_strided_slice %250 {offsets = [4, 0], sizes = [2, 128], strides = [1, 1]} : vector<16x128xf32> to vector<2x128xf32>
    %307 = vector.extract_strided_slice %257 {offsets = [10, 0], sizes = [2, 128], strides = [1, 1]} : vector<16x128xf32> to vector<2x128xf32>
    %308 = tpu.concatenate %306, %307 in 0 : vector<2x128xf32>, vector<2x128xf32> -> vector<4x128xf32>
    %309 = arith.addf %305, %308 : vector<4x128xf32>
    %310 = arith.negf %309 : vector<4x128xf32>
    %311 = math.exp %310 : vector<4x128xf32>
    %cst_90 = arith.constant 1.000000e+00 : f32
    %312 = vector.broadcast %cst_90 : f32 to vector<4x128xf32>
    %313 = arith.addf %312, %311 : vector<4x128xf32>
    %314 = arith.divf %312, %313 : vector<4x128xf32>
    %315 = math.tanh %309 : vector<4x128xf32>
    %316 = vector.extract_strided_slice %314 {offsets = [0, 0], sizes = [4, 32], strides = [1, 1]} : vector<4x128xf32> to vector<4x32xf32>
    %317 = vector.extract_strided_slice %314 {offsets = [0, 32], sizes = [4, 32], strides = [1, 1]} : vector<4x128xf32> to vector<4x32xf32>
    %318 = vector.extract_strided_slice %315 {offsets = [0, 64], sizes = [4, 32], strides = [1, 1]} : vector<4x128xf32> to vector<4x32xf32>
    %319 = vector.extract_strided_slice %314 {offsets = [0, 96], sizes = [4, 32], strides = [1, 1]} : vector<4x128xf32> to vector<4x32xf32>
    %320 = arith.mulf %317, %300 : vector<4x32xf32>
    %321 = arith.mulf %316, %318 : vector<4x32xf32>
    %322 = arith.addf %320, %321 : vector<4x32xf32>
    %323 = math.tanh %322 : vector<4x32xf32>
    %324 = arith.mulf %319, %323 : vector<4x32xf32>
    %325 = tpu.concatenate %324, %324 in 1 : vector<4x32xf32>, vector<4x32xf32> -> vector<4x64xf32>
    %326 = arith.mulf %325, %19 : vector<4x64xf32>
    %cst_91 = arith.constant dense<0.000000e+00> : vector<4x128xf32>
    %327 = tpu.matmul %326, %258, %cst_91 {dimension_numbers = #tpu.dot_dimension_numbers<[1], [0], [0], [1], [0, 0, 1, 1], [], []>} : vector<4x64xf32>, vector<64x128xf32>, vector<4x128xf32> -> vector<4x128xf32>
    %328 = vector.extract_strided_slice %250 {offsets = [6, 0], sizes = [2, 128], strides = [1, 1]} : vector<16x128xf32> to vector<2x128xf32>
    %329 = vector.extract_strided_slice %257 {offsets = [8, 0], sizes = [2, 128], strides = [1, 1]} : vector<16x128xf32> to vector<2x128xf32>
    %330 = tpu.concatenate %328, %329 in 0 : vector<2x128xf32>, vector<2x128xf32> -> vector<4x128xf32>
    %331 = arith.addf %327, %330 : vector<4x128xf32>
    %332 = arith.negf %331 : vector<4x128xf32>
    %333 = math.exp %332 : vector<4x128xf32>
    %cst_92 = arith.constant 1.000000e+00 : f32
    %334 = vector.broadcast %cst_92 : f32 to vector<4x128xf32>
    %335 = arith.addf %334, %333 : vector<4x128xf32>
    %336 = arith.divf %334, %335 : vector<4x128xf32>
    %337 = math.tanh %331 : vector<4x128xf32>
    %338 = vector.extract_strided_slice %336 {offsets = [0, 0], sizes = [4, 32], strides = [1, 1]} : vector<4x128xf32> to vector<4x32xf32>
    %339 = vector.extract_strided_slice %336 {offsets = [0, 32], sizes = [4, 32], strides = [1, 1]} : vector<4x128xf32> to vector<4x32xf32>
    %340 = vector.extract_strided_slice %337 {offsets = [0, 64], sizes = [4, 32], strides = [1, 1]} : vector<4x128xf32> to vector<4x32xf32>
    %341 = vector.extract_strided_slice %336 {offsets = [0, 96], sizes = [4, 32], strides = [1, 1]} : vector<4x128xf32> to vector<4x32xf32>
    %342 = arith.mulf %339, %322 : vector<4x32xf32>
    %343 = arith.mulf %338, %340 : vector<4x32xf32>
    %344 = arith.addf %342, %343 : vector<4x32xf32>
    %345 = math.tanh %344 : vector<4x32xf32>
    %346 = arith.mulf %341, %345 : vector<4x32xf32>
    %347 = tpu.concatenate %346, %346 in 1 : vector<4x32xf32>, vector<4x32xf32> -> vector<4x64xf32>
    %348 = arith.mulf %347, %19 : vector<4x64xf32>
    %cst_93 = arith.constant dense<0.000000e+00> : vector<4x128xf32>
    %349 = tpu.matmul %348, %258, %cst_93 {dimension_numbers = #tpu.dot_dimension_numbers<[1], [0], [0], [1], [0, 0, 1, 1], [], []>} : vector<4x64xf32>, vector<64x128xf32>, vector<4x128xf32> -> vector<4x128xf32>
    %350 = vector.extract_strided_slice %250 {offsets = [8, 0], sizes = [2, 128], strides = [1, 1]} : vector<16x128xf32> to vector<2x128xf32>
    %351 = vector.extract_strided_slice %257 {offsets = [6, 0], sizes = [2, 128], strides = [1, 1]} : vector<16x128xf32> to vector<2x128xf32>
    %352 = tpu.concatenate %350, %351 in 0 : vector<2x128xf32>, vector<2x128xf32> -> vector<4x128xf32>
    %353 = arith.addf %349, %352 : vector<4x128xf32>
    %354 = arith.negf %353 : vector<4x128xf32>
    %355 = math.exp %354 : vector<4x128xf32>
    %cst_94 = arith.constant 1.000000e+00 : f32
    %356 = vector.broadcast %cst_94 : f32 to vector<4x128xf32>
    %357 = arith.addf %356, %355 : vector<4x128xf32>
    %358 = arith.divf %356, %357 : vector<4x128xf32>
    %359 = math.tanh %353 : vector<4x128xf32>
    %360 = vector.extract_strided_slice %358 {offsets = [0, 0], sizes = [4, 32], strides = [1, 1]} : vector<4x128xf32> to vector<4x32xf32>
    %361 = vector.extract_strided_slice %358 {offsets = [0, 32], sizes = [4, 32], strides = [1, 1]} : vector<4x128xf32> to vector<4x32xf32>
    %362 = vector.extract_strided_slice %359 {offsets = [0, 64], sizes = [4, 32], strides = [1, 1]} : vector<4x128xf32> to vector<4x32xf32>
    %363 = vector.extract_strided_slice %358 {offsets = [0, 96], sizes = [4, 32], strides = [1, 1]} : vector<4x128xf32> to vector<4x32xf32>
    %364 = arith.mulf %361, %344 : vector<4x32xf32>
    %365 = arith.mulf %360, %362 : vector<4x32xf32>
    %366 = arith.addf %364, %365 : vector<4x32xf32>
    %367 = math.tanh %366 : vector<4x32xf32>
    %368 = arith.mulf %363, %367 : vector<4x32xf32>
    %369 = tpu.concatenate %368, %368 in 1 : vector<4x32xf32>, vector<4x32xf32> -> vector<4x64xf32>
    %370 = arith.mulf %369, %19 : vector<4x64xf32>
    %cst_95 = arith.constant dense<0.000000e+00> : vector<4x128xf32>
    %371 = tpu.matmul %370, %258, %cst_95 {dimension_numbers = #tpu.dot_dimension_numbers<[1], [0], [0], [1], [0, 0, 1, 1], [], []>} : vector<4x64xf32>, vector<64x128xf32>, vector<4x128xf32> -> vector<4x128xf32>
    %372 = vector.extract_strided_slice %250 {offsets = [10, 0], sizes = [2, 128], strides = [1, 1]} : vector<16x128xf32> to vector<2x128xf32>
    %373 = vector.extract_strided_slice %257 {offsets = [4, 0], sizes = [2, 128], strides = [1, 1]} : vector<16x128xf32> to vector<2x128xf32>
    %374 = tpu.concatenate %372, %373 in 0 : vector<2x128xf32>, vector<2x128xf32> -> vector<4x128xf32>
    %375 = arith.addf %371, %374 : vector<4x128xf32>
    %376 = arith.negf %375 : vector<4x128xf32>
    %377 = math.exp %376 : vector<4x128xf32>
    %cst_96 = arith.constant 1.000000e+00 : f32
    %378 = vector.broadcast %cst_96 : f32 to vector<4x128xf32>
    %379 = arith.addf %378, %377 : vector<4x128xf32>
    %380 = arith.divf %378, %379 : vector<4x128xf32>
    %381 = math.tanh %375 : vector<4x128xf32>
    %382 = vector.extract_strided_slice %380 {offsets = [0, 0], sizes = [4, 32], strides = [1, 1]} : vector<4x128xf32> to vector<4x32xf32>
    %383 = vector.extract_strided_slice %380 {offsets = [0, 32], sizes = [4, 32], strides = [1, 1]} : vector<4x128xf32> to vector<4x32xf32>
    %384 = vector.extract_strided_slice %381 {offsets = [0, 64], sizes = [4, 32], strides = [1, 1]} : vector<4x128xf32> to vector<4x32xf32>
    %385 = vector.extract_strided_slice %380 {offsets = [0, 96], sizes = [4, 32], strides = [1, 1]} : vector<4x128xf32> to vector<4x32xf32>
    %386 = arith.mulf %383, %366 : vector<4x32xf32>
    %387 = arith.mulf %382, %384 : vector<4x32xf32>
    %388 = arith.addf %386, %387 : vector<4x32xf32>
    %389 = math.tanh %388 : vector<4x32xf32>
    %390 = arith.mulf %385, %389 : vector<4x32xf32>
    %391 = tpu.concatenate %390, %390 in 1 : vector<4x32xf32>, vector<4x32xf32> -> vector<4x64xf32>
    %392 = arith.mulf %391, %19 : vector<4x64xf32>
    %cst_97 = arith.constant dense<0.000000e+00> : vector<4x128xf32>
    %393 = tpu.matmul %392, %258, %cst_97 {dimension_numbers = #tpu.dot_dimension_numbers<[1], [0], [0], [1], [0, 0, 1, 1], [], []>} : vector<4x64xf32>, vector<64x128xf32>, vector<4x128xf32> -> vector<4x128xf32>
    %394 = vector.extract_strided_slice %250 {offsets = [12, 0], sizes = [2, 128], strides = [1, 1]} : vector<16x128xf32> to vector<2x128xf32>
    %395 = vector.extract_strided_slice %257 {offsets = [2, 0], sizes = [2, 128], strides = [1, 1]} : vector<16x128xf32> to vector<2x128xf32>
    %396 = tpu.concatenate %394, %395 in 0 : vector<2x128xf32>, vector<2x128xf32> -> vector<4x128xf32>
    %397 = arith.addf %393, %396 : vector<4x128xf32>
    %398 = arith.negf %397 : vector<4x128xf32>
    %399 = math.exp %398 : vector<4x128xf32>
    %cst_98 = arith.constant 1.000000e+00 : f32
    %400 = vector.broadcast %cst_98 : f32 to vector<4x128xf32>
    %401 = arith.addf %400, %399 : vector<4x128xf32>
    %402 = arith.divf %400, %401 : vector<4x128xf32>
    %403 = math.tanh %397 : vector<4x128xf32>
    %404 = vector.extract_strided_slice %402 {offsets = [0, 0], sizes = [4, 32], strides = [1, 1]} : vector<4x128xf32> to vector<4x32xf32>
    %405 = vector.extract_strided_slice %402 {offsets = [0, 32], sizes = [4, 32], strides = [1, 1]} : vector<4x128xf32> to vector<4x32xf32>
    %406 = vector.extract_strided_slice %403 {offsets = [0, 64], sizes = [4, 32], strides = [1, 1]} : vector<4x128xf32> to vector<4x32xf32>
    %407 = vector.extract_strided_slice %402 {offsets = [0, 96], sizes = [4, 32], strides = [1, 1]} : vector<4x128xf32> to vector<4x32xf32>
    %408 = arith.mulf %405, %388 : vector<4x32xf32>
    %409 = arith.mulf %404, %406 : vector<4x32xf32>
    %410 = arith.addf %408, %409 : vector<4x32xf32>
    %411 = math.tanh %410 : vector<4x32xf32>
    %412 = arith.mulf %407, %411 : vector<4x32xf32>
    %413 = tpu.concatenate %412, %412 in 1 : vector<4x32xf32>, vector<4x32xf32> -> vector<4x64xf32>
    %414 = arith.mulf %413, %19 : vector<4x64xf32>
    %cst_99 = arith.constant dense<0.000000e+00> : vector<4x128xf32>
    %415 = tpu.matmul %414, %258, %cst_99 {dimension_numbers = #tpu.dot_dimension_numbers<[1], [0], [0], [1], [0, 0, 1, 1], [], []>} : vector<4x64xf32>, vector<64x128xf32>, vector<4x128xf32> -> vector<4x128xf32>
    %416 = vector.extract_strided_slice %250 {offsets = [14, 0], sizes = [2, 128], strides = [1, 1]} : vector<16x128xf32> to vector<2x128xf32>
    %417 = vector.extract_strided_slice %257 {offsets = [0, 0], sizes = [2, 128], strides = [1, 1]} : vector<16x128xf32> to vector<2x128xf32>
    %418 = tpu.concatenate %416, %417 in 0 : vector<2x128xf32>, vector<2x128xf32> -> vector<4x128xf32>
    %419 = arith.addf %415, %418 : vector<4x128xf32>
    %420 = arith.negf %419 : vector<4x128xf32>
    %421 = math.exp %420 : vector<4x128xf32>
    %cst_100 = arith.constant 1.000000e+00 : f32
    %422 = vector.broadcast %cst_100 : f32 to vector<4x128xf32>
    %423 = arith.addf %422, %421 : vector<4x128xf32>
    %424 = arith.divf %422, %423 : vector<4x128xf32>
    %425 = math.tanh %419 : vector<4x128xf32>
    %426 = vector.extract_strided_slice %424 {offsets = [0, 0], sizes = [4, 32], strides = [1, 1]} : vector<4x128xf32> to vector<4x32xf32>
    %427 = vector.extract_strided_slice %424 {offsets = [0, 32], sizes = [4, 32], strides = [1, 1]} : vector<4x128xf32> to vector<4x32xf32>
    %428 = vector.extract_strided_slice %425 {offsets = [0, 64], sizes = [4, 32], strides = [1, 1]} : vector<4x128xf32> to vector<4x32xf32>
    %429 = vector.extract_strided_slice %424 {offsets = [0, 96], sizes = [4, 32], strides = [1, 1]} : vector<4x128xf32> to vector<4x32xf32>
    %430 = arith.mulf %427, %410 : vector<4x32xf32>
    %431 = arith.mulf %426, %428 : vector<4x32xf32>
    %432 = arith.addf %430, %431 : vector<4x32xf32>
    %433 = math.tanh %432 : vector<4x32xf32>
    %434 = arith.mulf %429, %433 : vector<4x32xf32>
    %435 = vector.extract_strided_slice %434 {offsets = [0, 0], sizes = [2, 32], strides = [1, 1]} : vector<4x32xf32> to vector<2x32xf32>
    %436 = vector.extract_strided_slice %434 {offsets = [2, 0], sizes = [2, 32], strides = [1, 1]} : vector<4x32xf32> to vector<2x32xf32>
    %437 = tpu.concatenate %435, %436 in 1 : vector<2x32xf32>, vector<2x32xf32> -> vector<2x64xf32>
    %c0_101 = arith.constant 0 : index
    %c0_102 = arith.constant 0 : index
    %438 = vector.load %arg9[%c0_101, %c0_102] : memref<64x4xf32, #tpu.memory_space<vmem>>, vector<64x4xf32>
    %cst_103 = arith.constant dense<0.000000e+00> : vector<2x4xf32>
    %439 = tpu.matmul %437, %438, %cst_103 {dimension_numbers = #tpu.dot_dimension_numbers<[1], [0], [0], [1], [0, 0, 1, 1], [], []>} : vector<2x64xf32>, vector<64x4xf32>, vector<2x4xf32> -> vector<2x4xf32>
    %c0_104 = arith.constant 0 : index
    %c0_105 = arith.constant 0 : index
    %440 = vector.load %arg10[%c0_104, %c0_105] : memref<1x4xf32, #tpu.memory_space<vmem>>, vector<1x4xf32>
    %441 = vector.broadcast %440 : vector<1x4xf32> to vector<2x4xf32>
    %442 = arith.addf %439, %441 : vector<2x4xf32>
    %c0_106 = arith.constant 0 : index
    %c0_107 = arith.constant 0 : index
    %443 = vector.load %arg11[%c0_106, %c0_107] : memref<2x4xf32, #tpu.memory_space<vmem>>, vector<2x4xf32>
    tpu.vector_store %arg11[%c0_106, %c0_107], %442 {strides = array<i32>} : memref<2x4xf32, #tpu.memory_space<vmem>>, vector<2x4xf32>,
    return
  }
  func.func @transform_0(%arg0: i32) -> (i32, i32) {
    %c0_i32 = arith.constant 0 : i32
    %c0_i32_0 = arith.constant 0 : i32
    %c0_i32_1 = arith.constant 0 : i32
    return %c0_i32, %c0_i32_0 : i32, i32
  }
  func.func @transform_1(%arg0: i32) -> (i32, i32) {
    %c0_i32 = arith.constant 0 : i32
    %c0_i32_0 = arith.constant 0 : i32
    %c0_i32_1 = arith.constant 0 : i32
    return %c0_i32, %c0_i32_0 : i32, i32
  }
  func.func @transform_2(%arg0: i32) -> (i32, i32, i32) {
    %c0_i32 = arith.constant 0 : i32
    %c0_i32_0 = arith.constant 0 : i32
    %c0_i32_1 = arith.constant 0 : i32
    %c0_i32_2 = arith.constant 0 : i32
    return %c0_i32, %c0_i32_0, %c0_i32_1 : i32, i32, i32
  }
  func.func @transform_3(%arg0: i32) -> (i32, i32) {
    %c0_i32 = arith.constant 0 : i32
    %c0_i32_0 = arith.constant 0 : i32
    %c0_i32_1 = arith.constant 0 : i32
    return %c0_i32, %c0_i32_0 : i32, i32
  }
  func.func @transform_4(%arg0: i32) -> (i32, i32, i32) {
    %c0_i32 = arith.constant 0 : i32
    %c0_i32_0 = arith.constant 0 : i32
    %c0_i32_1 = arith.constant 0 : i32
    %c0_i32_2 = arith.constant 0 : i32
    return %c0_i32, %c0_i32_0, %c0_i32_1 : i32, i32, i32
  }
  func.func @transform_5(%arg0: i32) -> (i32, i32, i32) {
    %c0_i32 = arith.constant 0 : i32
    %c0_i32_0 = arith.constant 0 : i32
    %c0_i32_1 = arith.constant 0 : i32
    %c0_i32_2 = arith.constant 0 : i32
    return %c0_i32, %c0_i32_0, %c0_i32_1 : i32, i32, i32
  }
  func.func @transform_6(%arg0: i32) -> (i32, i32) {
    %c0_i32 = arith.constant 0 : i32
    %c0_i32_0 = arith.constant 0 : i32
    %c0_i32_1 = arith.constant 0 : i32
    return %c0_i32, %c0_i32_0 : i32, i32
  }
  func.func @transform_7(%arg0: i32) -> (i32, i32, i32) {
    %c0_i32 = arith.constant 0 : i32
    %c0_i32_0 = arith.constant 0 : i32
    %c0_i32_1 = arith.constant 0 : i32
    %c0_i32_2 = arith.constant 0 : i32
    return %c0_i32, %c0_i32_0, %c0_i32_1 : i32, i32, i32
  }
  func.func @transform_8(%arg0: i32) -> (i32, i32) {
    %c0_i32 = arith.constant 0 : i32
    %c0_i32_0 = arith.constant 0 : i32
    %c0_i32_1 = arith.constant 0 : i32
    return %c0_i32, %c0_i32_0 : i32, i32
  }
  func.func @transform_9(%arg0: i32) -> (i32, i32) {
    %c0_i32 = arith.constant 0 : i32
    %c0_i32_0 = arith.constant 0 : i32
    %c0_i32_1 = arith.constant 0 : i32
    return %c0_i32, %c0_i32_0 : i32, i32
  }
  func.func @transform_10(%arg0: i32) -> (i32, i32) {
    %c0_i32 = arith.constant 0 : i32
    %c0_i32_0 = arith.constant 0 : i32
    %c0_i32_1 = arith.constant 0 : i32
    return %c0_i32, %c0_i32_0 : i32, i32
  }
}

</mosaic_0001>

<llo_original>
// kernel: textrnn_forward.1
$region0: #{textrnn_forward.1}
  #allocation0 [shape = 'u32[]', space=smem, size = 0x4, offset = 0x4, fixed_abs, tag = 'smem constant byte address 0x4 - core index']
  #allocation1 [shape = 'u32[72,128]{1,0:T(1,128)}', space=vmem, size = 0x9000, scoped, tag = 'internal scratch']
  #allocation2 [shape = 'f32[16,64]{1,0:T(8,128)}', space=vmem, size = 0x2000, scoped, tag = 'scratch operand']
  %s0 = inlined_call_operand.vmem [shape: s32[16,1], index: 0, kind: input, shape index: {}]
  %s1 = inlined_call_operand.vmem [shape: f32[128,16], index: 1, kind: input, shape index: {}]
  %s2 = inlined_call_operand.hbm [shape: f32[2,16,128], index: 2, kind: input, shape index: {}]
  %s3 = inlined_call_operand.vmem [shape: f32[64,128], index: 3, kind: input, shape index: {}]
  %s4 = inlined_call_operand.vmem [shape: f32[2,1,128], index: 4, kind: input, shape index: {}]
  %s5 = inlined_call_operand.vmem [shape: f32[2,64,128], index: 5, kind: input, shape index: {}]
  %s6 = inlined_call_operand.hbm [shape: f32[64,128], index: 6, kind: input, shape index: {}]
  %s7 = inlined_call_operand.vmem [shape: f32[2,1,128], index: 7, kind: input, shape index: {}]
  %s8 = inlined_call_operand.vmem [shape: f32[64,4], index: 8, kind: input, shape index: {}]
  %s9 = inlined_call_operand.vmem [shape: f32[1,4], index: 9, kind: input, shape index: {}]
  %s10 = inlined_call_operand.hbm [shape: f32[2,4], index: 10, kind: output, shape index: {}]
  %s11 = sld [smem:[#allocation0]]
  $region58: #{textrnn_forward.1} parent=0
    _
  %s13 = ssub.s32 1, %s11
  %s14 = scalar_select 0, %s13, %s11
  $region1: #{textrnn_forward.1} parent=0
    #allocation3 [shape = 'u8[16384]{0}', space=vmem, size = 0x4000, scoped, tag = 'input window, operand 2, single buffered']
    #allocation4 [shape = 's32[1]{0}', space=sflag, size = 0x4, scoped, tag = 'scoped memory for textrnn_forward.1']
    #allocation5 [shape = 's32[1]{0}', space=sflag, size = 0x4, scoped, tag = 'scoped memory for textrnn_forward.1']
    #allocation6 [shape = 'u8[32768]{0}', space=vmem, size = 0x8000, scoped, tag = 'input window, operand 6, single buffered']
    #allocation7 [shape = 's32[1]{0}', space=sflag, size = 0x4, scoped, tag = 'scoped memory for textrnn_forward.1']
    #allocation8 [shape = 'u8[1024]{0}', space=vmem, size = 0x400, scoped, tag = 'output window, operand 0, single buffered']
    %15 = vsyncpa [#allocation4], 0
    %16 = vsyncpa [#allocation7], 0
    %17 = vsyncpa [#allocation5], 0
    // Predicated region
    $region2: #{textrnn_forward.1} parent=1 // pred_check
      _
    $region3: #{textrnn_forward.1} parent=1 // pred_check_branch
      %19 = sbr.rel (0) target = $region5
    $region4: #{textrnn_forward.1} parent=1 // pred_region
      _
    $region5: #{textrnn_forward.1} parent=1 // pred_fallthru
      _
    // Predicated region
    $region6: #{textrnn_forward.1} parent=1 // pred_check
      _
    $region7: #{textrnn_forward.1} parent=1 // pred_check_branch
      %21 = sbr.rel (0) target = $region9
    $region8: #{textrnn_forward.1} parent=1 // pred_region
      _
    $region9: #{textrnn_forward.1} parent=1 // pred_fallthru
      _
    // Predicated region
    $region10: #{textrnn_forward.1} parent=1 // pred_check
      _
    $region11: #{textrnn_forward.1} parent=1 // pred_check_branch
      %23 = sbr.rel (0) target = $region13
    $region12: #{textrnn_forward.1} parent=1 // pred_region
      %25 = vsyncadd [#allocation4], 0
      %s26 = sshll.u32 %s2, 4
      %s27 = int_to_ptr.hbm [resolvable:$true] %s26
      %s28 = sshll.u32 [#allocation3], 4
      %s29 = int_to_ptr.vmem [resolvable:$true] %s28
      %34 = dma.hbm_to_vmem [thread:$0]  %s27, 512, %s29, [#allocation4], 128, 128, 8
    $region13: #{textrnn_forward.1} parent=1 // pred_fallthru
      _
    // Predicated region
    $region14: #{textrnn_forward.1} parent=1 // pred_check
      _
    $region15: #{textrnn_forward.1} parent=1 // pred_check_branch
      %36 = sbr.rel (0) target = $region17
    $region16: #{textrnn_forward.1} parent=1 // pred_region
      _
    $region17: #{textrnn_forward.1} parent=1 // pred_fallthru
      _
    // Predicated region
    $region18: #{textrnn_forward.1} parent=1 // pred_check
      _
    $region19: #{textrnn_forward.1} parent=1 // pred_check_branch
      %38 = sbr.rel (0) target = $region21
    $region20: #{textrnn_forward.1} parent=1 // pred_region
      _
    $region21: #{textrnn_forward.1} parent=1 // pred_fallthru
      _
    // Predicated region
    $region22: #{textrnn_forward.1} parent=1 // pred_check
      _
    $region23: #{textrnn_forward.1} parent=1 // pred_check_branch
      %40 = sbr.rel (0) target = $region25
    $region24: #{textrnn_forward.1} parent=1 // pred_region
      _
    $region25: #{textrnn_forward.1} parent=1 // pred_fallthru
      _
    // Predicated region
    $region26: #{textrnn_forward.1} parent=1 // pred_check
      _
    $region27: #{textrnn_forward.1} parent=1 // pred_check_branch
      %42 = sbr.rel (0) target = $region29
    $region28: #{textrnn_forward.1} parent=1 // pred_region
      %44 = vsyncadd [#allocation7], 0
      %s45 = sshll.u32 %s6, 4
      %s46 = int_to_ptr.hbm [resolvable:$true] %s45
      %s47 = sshll.u32 [#allocation6], 4
      %s48 = int_to_ptr.vmem [resolvable:$true] %s47
      %53 = dma.hbm_to_vmem [thread:$0]  %s46, 1024, %s48, [#allocation7], 128, 128, 8
    $region29: #{textrnn_forward.1} parent=1 // pred_fallthru
      _
    // Predicated region
    $region30: #{textrnn_forward.1} parent=1 // pred_check
      _
    $region31: #{textrnn_forward.1} parent=1 // pred_check_branch
      %55 = sbr.rel (0) target = $region33
    $region32: #{textrnn_forward.1} parent=1 // pred_region
      _
    $region33: #{textrnn_forward.1} parent=1 // pred_fallthru
      _
    // Predicated region
    $region34: #{textrnn_forward.1} parent=1 // pred_check
      _
    $region35: #{textrnn_forward.1} parent=1 // pred_check_branch
      %57 = sbr.rel (0) target = $region37
    $region36: #{textrnn_forward.1} parent=1 // pred_region
      _
    $region37: #{textrnn_forward.1} parent=1 // pred_fallthru
      _
    // Predicated region
    $region38: #{textrnn_forward.1} parent=1 // pred_check
      _
    $region39: #{textrnn_forward.1} parent=1 // pred_check_branch
      %59 = sbr.rel (0) target = $region41
    $region40: #{textrnn_forward.1} parent=1 // pred_region
      _
    $region41: #{textrnn_forward.1} parent=1 // pred_fallthru
      _
    // Predicated region
    $region42: #{textrnn_forward.1} parent=1 // pred_check
      _
    $region43: #{textrnn_forward.1} parent=1 // pred_check_branch
      %61 = sbr.rel (0) target = $region45
    $region44: #{textrnn_forward.1} parent=1 // pred_region
      %63 = dma.done [#allocation4], 512
    $region45: #{textrnn_forward.1} parent=1 // pred_fallthru
      _
    // Predicated region
    $region46: #{textrnn_forward.1} parent=1 // pred_check
      _
    $region47: #{textrnn_forward.1} parent=1 // pred_check_branch
      %65 = sbr.rel (0) target = $region49
    $region48: #{textrnn_forward.1} parent=1 // pred_region
      %67 = dma.done [#allocation7], 1024
    $region49: #{textrnn_forward.1} parent=1 // pred_fallthru
      _
    %v68 = vld [vmem:[%s0] sm:$0xff]
    %v69 = vld [vmem:[%s0 + $0x8] sm:$0xff]
    %v70 = vlaneseq
    %v71 = vand.u32 %v70, 127
    %72 = vset.pattern.permute.xlu0 0
    %73 = vperm.xlu0 %72, %v68
    %v74 = vpop.permute.xlu0 %73
    %75 = vset.pattern.permute.xlu0 0
    %76 = vperm.xlu0 %75, %v69
    %v77 = vpop.permute.xlu0 %76
    %vm78 = vcmp.eq.s32.totalorder %v71, %v74
    %vm79 = vcmp.eq.s32.totalorder %v71, %v77
    %v80 = vsel %vm78, 1.0, 0.0
    %v81 = vsel %vm79, 1.0, 0.0
    %v82 = vld [vmem:[%s1] sm:$0xff]
    %v83 = vld [vmem:[%s1 + $0x8] sm:$0xff]
    %v84 = vld [vmem:[%s1 + $0x10] sm:$0xff]
    %v85 = vld [vmem:[%s1 + $0x18] sm:$0xff]
    %v86 = vld [vmem:[%s1 + $0x20] sm:$0xff]
    %v87 = vld [vmem:[%s1 + $0x28] sm:$0xff]
    %v88 = vld [vmem:[%s1 + $0x30] sm:$0xff]
    %v89 = vld [vmem:[%s1 + $0x38] sm:$0xff]
    %v90 = vld [vmem:[%s1 + $0x40] sm:$0xff]
    %v91 = vld [vmem:[%s1 + $0x48] sm:$0xff]
    %v92 = vld [vmem:[%s1 + $0x50] sm:$0xff]
    %v93 = vld [vmem:[%s1 + $0x58] sm:$0xff]
    %v94 = vld [vmem:[%s1 + $0x60] sm:$0xff]
    %v95 = vld [vmem:[%s1 + $0x68] sm:$0xff]
    %v96 = vld [vmem:[%s1 + $0x70] sm:$0xff]
    %v97 = vld [vmem:[%s1 + $0x78] sm:$0xff]
    %98 = vmatpush.msra.mxu0 %v97
    %99 = vmatpush.msra.mxu0 %v96
    %100 = vmatpush.msra.mxu0 %v95
    %101 = vmatpush.msra.mxu0 %v94
    %102 = vmatpush.msra.mxu0 %v93
    %103 = vmatpush.msra.mxu0 %v92
    %104 = vmatpush.msra.mxu0 %v91
    %105 = vmatpush.msra.mxu0 %v90
    %106 = vmatpush.msra.mxu0 %v89
    %107 = vmatpush.msra.mxu0 %v88
    %108 = vmatpush.msra.mxu0 %v87
    %109 = vmatpush.msra.mxu0 %v86
    %110 = vmatpush.msra.mxu0 %v85
    %111 = vmatpush.msra.mxu0 %v84
    %112 = vmatpush.msra.mxu0 %v83
    %113 = vmatpush.msra.mxu0 %v82
    %114 = vmatmul.f32.gmra.mxu0 %v80
    %v115 = vpop.f32.mrf.mxu0
    %v116 = vadd.f32 0.0, %v115
    %117 = vmatmul.f32.gmra.mxu0 %v81
    %v118 = vpop.f32.mrf.mxu0
    %v119 = vadd.f32 0.0, %v118
    %120 = vdwg.mxu0
    %v121 = vlaneseq
    %v122 = vshrl.u32 %v121, 7
    %vm123 = vcmp.lt.s32.totalorder %v122, 2
    %vm124 = vcmp.lt.s32.totalorder %v71, 32
    %vm125 = vmxor %vm123, %vm124
    %vm126 = vmxor %vm125, 1
    %v127 = vsel %vm126, 1.0, 0.0
    %v128 = vld [vmem:[#allocation3] sm:$0xff]
    %v129 = vld [vmem:[#allocation3 + $0x8] sm:$0xff]
    %v130 = vld [vmem:[%s4] sm:$0x1]
    %v132 = vperm.slane %v130, 0
    %vm134 = vcmask 130048
    %v136 = vsel %vm134, %v116, 0
    %v139 = vsel %vm134, %v119, 0
    %141 = vmatpush.msra.mxu0 0.0
    %142 = vmatpush.msra.mxu0 0.0
    %143 = vmatpush.msra.mxu0 0.0
    %144 = vmatpush.msra.mxu0 0.0
    %145 = vmatpush.msra.mxu0 0.0
    %146 = vmatpush.msra.mxu0 0.0
    %147 = vmatpush.msra.mxu0 0.0
    %148 = vmatpush.msra.mxu0 0.0
    %149 = vmatpush.msra.mxu0 0.0
    %150 = vmatpush.msra.mxu0 0.0
    %151 = vmatpush.msra.mxu0 0.0
    %152 = vmatpush.msra.mxu0 0.0
    %153 = vmatpush.msra.mxu0 0.0
    %154 = vmatpush.msra.mxu0 0.0
    %155 = vmatpush.msra.mxu0 %v129
    %156 = vmatpush.msra.mxu0 %v128
    %157 = vmatmul.f32.gmra.mxu0 %v136
    %v158 = vpop.f32.mrf.mxu0
    %v159 = vadd.f32 %v132, %v158
    %160 = vmatmul.f32.gmra.mxu0 %v139
    %v161 = vpop.f32.mrf.mxu0
    %v162 = vadd.f32 %v132, %v161
    %163 = vdwg.mxu0
    %s164 = scalar_lea.vmem [#allocation3], 16
    %v165 = vld [vmem:[%s164] sm:$0xff]
    %v166 = vld [vmem:[%s164 + $0x8] sm:$0xff]
    %s167 = scalar_lea.vmem %s4, 1
    %v168 = vld [vmem:[%s167] sm:$0x1]
    %v170 = vperm.slane %v168, 0
    %172 = vmatpush.msra.mxu0 0.0
    %173 = vmatpush.msra.mxu0 0.0
    %174 = vmatpush.msra.mxu0 0.0
    %175 = vmatpush.msra.mxu0 0.0
    %176 = vmatpush.msra.mxu0 0.0
    %177 = vmatpush.msra.mxu0 0.0
    %178 = vmatpush.msra.mxu0 0.0
    %179 = vmatpush.msra.mxu0 0.0
    %180 = vmatpush.msra.mxu0 0.0
    %181 = vmatpush.msra.mxu0 0.0
    %182 = vmatpush.msra.mxu0 0.0
    %183 = vmatpush.msra.mxu0 0.0
    %184 = vmatpush.msra.mxu0 0.0
    %185 = vmatpush.msra.mxu0 0.0
    %186 = vmatpush.msra.mxu0 %v166
    %187 = vmatpush.msra.mxu0 %v165
    %188 = vmatmul.f32.gmra.mxu0 %v136
    %v189 = vpop.f32.mrf.mxu0
    %v190 = vadd.f32 %v170, %v189
    %191 = vmatmul.f32.gmra.mxu0 %v139
    %v192 = vpop.f32.mrf.mxu0
    %v193 = vadd.f32 %v170, %v192
    %194 = vdwg.mxu0
    %v195 = vld [vmem:[%s3] sm:$0xff]
    %v196 = vld [vmem:[%s3 + $0x8] sm:$0xff]
    %v197 = vld [vmem:[%s3 + $0x10] sm:$0xff]
    %v198 = vld [vmem:[%s3 + $0x18] sm:$0xff]
    %v199 = vld [vmem:[%s3 + $0x20] sm:$0xff]
    %v200 = vld [vmem:[%s3 + $0x28] sm:$0xff]
    %v201 = vld [vmem:[%s3 + $0x30] sm:$0xff]
    %v202 = vld [vmem:[%s3 + $0x38] sm:$0xff]
    %v204 = vrot.slane %v193, 4
    %vm206 = vcmask 1041408
    %v207 = vsel %vm206, %v159, %v204
    %vm208 = vcmask 523264
    %v210 = vsel %vm208, 0.0, 0
    %212 = vmatpush.msra.mxu0 0.0
    %213 = vmatpush.msra.mxu0 0.0
    %214 = vmatpush.msra.mxu0 0.0
    %215 = vmatpush.msra.mxu0 0.0
    %216 = vmatpush.msra.mxu0 0.0
    %217 = vmatpush.msra.mxu0 0.0
    %218 = vmatpush.msra.mxu0 0.0
    %219 = vmatpush.msra.mxu0 0.0
    %220 = vmatpush.msra.mxu0 %v202
    %221 = vmatpush.msra.mxu0 %v201
    %222 = vmatpush.msra.mxu0 %v200
    %223 = vmatpush.msra.mxu0 %v199
    %224 = vmatpush.msra.mxu0 %v198
    %225 = vmatpush.msra.mxu0 %v197
    %226 = vmatpush.msra.mxu0 %v196
    %227 = vmatpush.msra.mxu0 %v195
    %228 = vmatmul.f32.gmra.mxu0 %v210
    %v229 = vpop.f32.mrf.mxu0
    %v230 = vadd.f32 %v207, %v229
    %231 = vdwg.mxu0
    %v232 = vxor.u32 %v230, 2147483648
    %v233 = vmul.f32 %v232, 1.442695
    %v234 = vpow.pop %v233
    %v235 = vadd.f32 %v234, 1.0
    %v236 = vrcp.pop %v235
    %v237 = vmul.f32 %v235, %v236
    %v238 = vsub.f32 1.0, %v237
    %v239 = vmul.f32 %v236, %v238
    %v240 = vadd.f32 %v236, %v239
    %vm241 = vweird.f32 %v235
    %vm242 = vweird.f32 %v236
    %vm243 = vmor %vm241, %vm242
    %v244 = vsel %vm243, %v236, %v240
    %v245 = vand.u32 2147483647, %v235
    %vm246 = vcmp.eq.f32.partialorder %v245, 8.507059e+37
    %v247 = vand.u32 %v235, 2147483648
    %v248 = vor.u32 1.1754944e-38, %v247
    %v249 = vsel %vm246, %v248, %v244
    %v250 = vmul.f32 1.0, %v249
    %v251 = vtanh.pop %v230
    %v252 = vmul.f32 %v250, 0.0
    %254 = vrot.lane.b32.xlu0 %v251, 64
    %v255 = vpop.permute.xlu0 %254
    %v257 = vmul.f32 %v250, %v255
    %259 = vrot.lane.b32.xlu0 %v257, 32
    %v260 = vpop.permute.xlu0 %259
    %v262 = vadd.f32 %v252, %v260
    %v263 = vtanh.pop %v262
    %265 = vrot.lane.b32.xlu0 %v263, 64
    %v266 = vpop.permute.xlu0 %265
    %v268 = vmul.f32 %v250, %v266
    %270 = vrot.lane.b32.xlu0 %v268, 32
    %v271 = vpop.permute.xlu0 %270
    %273 = vrot.lane.b32.xlu0 %v268, 64
    %v274 = vpop.permute.xlu0 %273
    %vm276 = vcmask 261120
    %v277 = vsel %vm276, %v271, %v274
    %v278 = vmul.f32 %v277, %v127
    %vm279 = vcmask 254976
    %280 = vst.msk [vmem:[#allocation2] sm:$0x3] %vm279, %v271
    %vm281 = vcmask 519426
    %282 = vst.msk [vmem:[#allocation2 + $0xc] sm:$0xc] %vm281, %v274
    %v284 = vrot.slane %v159, 2
    %v286 = vrot.slane %v193, 2
    %v288 = vsel %vm206, %v284, %v286
    %v290 = vsel %vm208, %v278, 0
    %292 = vmatpush.msra.mxu0 0.0
    %293 = vmatpush.msra.mxu0 0.0
    %294 = vmatpush.msra.mxu0 0.0
    %295 = vmatpush.msra.mxu0 0.0
    %296 = vmatpush.msra.mxu0 0.0
    %297 = vmatpush.msra.mxu0 0.0
    %298 = vmatpush.msra.mxu0 0.0
    %299 = vmatpush.msra.mxu0 0.0
    %300 = vmatpush.msra.mxu0 %v202
    %301 = vmatpush.msra.mxu0 %v201
    %302 = vmatpush.msra.mxu0 %v200
    %303 = vmatpush.msra.mxu0 %v199
    %304 = vmatpush.msra.mxu0 %v198
    %305 = vmatpush.msra.mxu0 %v197
    %306 = vmatpush.msra.mxu0 %v196
    %307 = vmatpush.msra.mxu0 %v195
    %308 = vmatmul.f32.gmra.mxu0 %v290
    %v309 = vpop.f32.mrf.mxu0
    %v310 = vadd.f32 %v288, %v309
    %311 = vdwg.mxu0
    %v312 = vxor.u32 %v310, 2147483648
    %v313 = vmul.f32 %v312, 1.442695
    %v314 = vpow.pop %v313
    %v315 = vadd.f32 %v314, 1.0
    %v316 = vrcp.pop %v315
    %v317 = vmul.f32 %v315, %v316
    %v318 = vsub.f32 1.0, %v317
    %v319 = vmul.f32 %v316, %v318
    %v320 = vadd.f32 %v316, %v319
    %vm321 = vweird.f32 %v315
    %vm322 = vweird.f32 %v316
    %vm323 = vmor %vm321, %vm322
    %v324 = vsel %vm323, %v316, %v320
    %v325 = vand.u32 2147483647, %v315
    %vm326 = vcmp.eq.f32.partialorder %v325, 8.507059e+37
    %v327 = vand.u32 %v315, 2147483648
    %v328 = vor.u32 1.1754944e-38, %v327
    %v329 = vsel %vm326, %v328, %v324
    %v330 = vmul.f32 1.0, %v329
    %v331 = vtanh.pop %v310
    %v332 = vmul.f32 %v330, %v262
    %334 = vrot.lane.b32.xlu0 %v331, 64
    %v335 = vpop.permute.xlu0 %334
    %v337 = vmul.f32 %v330, %v335
    %339 = vrot.lane.b32.xlu0 %v337, 32
    %v340 = vpop.permute.xlu0 %339
    %v342 = vadd.f32 %v332, %v340
    %v343 = vtanh.pop %v342
    %345 = vrot.lane.b32.xlu0 %v343, 64
    %v346 = vpop.permute.xlu0 %345
    %v348 = vmul.f32 %v330, %v346
    %350 = vrot.lane.b32.xlu0 %v348, 32
    %v351 = vpop.permute.xlu0 %350
    %353 = vrot.lane.b32.xlu0 %v348, 64
    %v354 = vpop.permute.xlu0 %353
    %v356 = vsel %vm276, %v351, %v354
    %v357 = vmul.f32 %v356, %v127
    %358 = vst.msk [vmem:[#allocation2 + $0x2] sm:$0x3] %vm279, %v351
    %359 = vst.msk [vmem:[#allocation2 + $0xa] sm:$0xc] %vm281, %v354
    %v360 = vrot.slane %v159, 4
    %v362 = vsel %vm206, %v360, %v193
    %v364 = vsel %vm208, %v357, 0
    %366 = vmatpush.msra.mxu0 0.0
    %367 = vmatpush.msra.mxu0 0.0
    %368 = vmatpush.msra.mxu0 0.0
    %369 = vmatpush.msra.mxu0 0.0
    %370 = vmatpush.msra.mxu0 0.0
    %371 = vmatpush.msra.mxu0 0.0
    %372 = vmatpush.msra.mxu0 0.0
    %373 = vmatpush.msra.mxu0 0.0
    %374 = vmatpush.msra.mxu0 %v202
    %375 = vmatpush.msra.mxu0 %v201
    %376 = vmatpush.msra.mxu0 %v200
    %377 = vmatpush.msra.mxu0 %v199
    %378 = vmatpush.msra.mxu0 %v198
    %379 = vmatpush.msra.mxu0 %v197
    %380 = vmatpush.msra.mxu0 %v196
    %381 = vmatpush.msra.mxu0 %v195
    %382 = vmatmul.f32.gmra.mxu0 %v364
    %v383 = vpop.f32.mrf.mxu0
    %v384 = vadd.f32 %v362, %v383
    %385 = vdwg.mxu0
    %v386 = vxor.u32 %v384, 2147483648
    %v387 = vmul.f32 %v386, 1.442695
    %v388 = vpow.pop %v387
    %v389 = vadd.f32 %v388, 1.0
    %v390 = vrcp.pop %v389
    %v391 = vmul.f32 %v389, %v390
    %v392 = vsub.f32 1.0, %v391
    %v393 = vmul.f32 %v390, %v392
    %v394 = vadd.f32 %v390, %v393
    %vm395 = vweird.f32 %v389
    %vm396 = vweird.f32 %v390
    %vm397 = vmor %vm395, %vm396
    %v398 = vsel %vm397, %v390, %v394
    %v399 = vand.u32 2147483647, %v389
    %vm400 = vcmp.eq.f32.partialorder %v399, 8.507059e+37
    %v401 = vand.u32 %v389, 2147483648
    %v402 = vor.u32 1.1754944e-38, %v401
    %v403 = vsel %vm400, %v402, %v398
    %v404 = vmul.f32 1.0, %v403
    %v405 = vtanh.pop %v384
    %v406 = vmul.f32 %v404, %v342
    %408 = vrot.lane.b32.xlu0 %v405, 64
    %v409 = vpop.permute.xlu0 %408
    %v411 = vmul.f32 %v404, %v409
    %413 = vrot.lane.b32.xlu0 %v411, 32
    %v414 = vpop.permute.xlu0 %413
    %v416 = vadd.f32 %v406, %v414
    %v417 = vtanh.pop %v416
    %419 = vrot.lane.b32.xlu0 %v417, 64
    %v420 = vpop.permute.xlu0 %419
    %v422 = vmul.f32 %v404, %v420
    %424 = vrot.lane.b32.xlu0 %v422, 32
    %v425 = vpop.permute.xlu0 %424
    %427 = vrot.lane.b32.xlu0 %v422, 64
    %v428 = vpop.permute.xlu0 %427
    %v430 = vsel %vm276, %v425, %v428
    %v431 = vmul.f32 %v430, %v127
    %432 = vst.msk [vmem:[#allocation2 + $0x4] sm:$0x3] %vm279, %v425
    %433 = vst.msk [vmem:[#allocation2 + $0x8] sm:$0xc] %vm281, %v428
    %v434 = vrot.slane %v159, 6
    %v436 = vrot.slane %v193, 6
    %v438 = vsel %vm206, %v434, %v436
    %v440 = vsel %vm208, %v431, 0
    %442 = vmatpush.msra.mxu0 0.0
    %443 = vmatpush.msra.mxu0 0.0
    %444 = vmatpush.msra.mxu0 0.0
    %445 = vmatpush.msra.mxu0 0.0
    %446 = vmatpush.msra.mxu0 0.0
    %447 = vmatpush.msra.mxu0 0.0
    %448 = vmatpush.msra.mxu0 0.0
    %449 = vmatpush.msra.mxu0 0.0
    %450 = vmatpush.msra.mxu0 %v202
    %451 = vmatpush.msra.mxu0 %v201
    %452 = vmatpush.msra.mxu0 %v200
    %453 = vmatpush.msra.mxu0 %v199
    %454 = vmatpush.msra.mxu0 %v198
    %455 = vmatpush.msra.mxu0 %v197
    %456 = vmatpush.msra.mxu0 %v196
    %457 = vmatpush.msra.mxu0 %v195
    %458 = vmatmul.f32.gmra.mxu0 %v440
    %v459 = vpop.f32.mrf.mxu0
    %v460 = vadd.f32 %v438, %v459
    %461 = vdwg.mxu0
    %v462 = vxor.u32 %v460, 2147483648
    %v463 = vmul.f32 %v462, 1.442695
    %v464 = vpow.pop %v463
    %v465 = vadd.f32 %v464, 1.0
    %v466 = vrcp.pop %v465
    %v467 = vmul.f32 %v465, %v466
    %v468 = vsub.f32 1.0, %v467
    %v469 = vmul.f32 %v466, %v468
    %v470 = vadd.f32 %v466, %v469
    %vm471 = vweird.f32 %v465
    %vm472 = vweird.f32 %v466
    %vm473 = vmor %vm471, %vm472
    %v474 = vsel %vm473, %v466, %v470
    %v475 = vand.u32 2147483647, %v465
    %vm476 = vcmp.eq.f32.partialorder %v475, 8.507059e+37
    %v477 = vand.u32 %v465, 2147483648
    %v478 = vor.u32 1.1754944e-38, %v477
    %v479 = vsel %vm476, %v478, %v474
    %v480 = vmul.f32 1.0, %v479
    %v481 = vtanh.pop %v460
    %v482 = vmul.f32 %v480, %v416
    %484 = vrot.lane.b32.xlu0 %v481, 64
    %v485 = vpop.permute.xlu0 %484
    %v487 = vmul.f32 %v480, %v485
    %489 = vrot.lane.b32.xlu0 %v487, 32
    %v490 = vpop.permute.xlu0 %489
    %v492 = vadd.f32 %v482, %v490
    %v493 = vtanh.pop %v492
    %495 = vrot.lane.b32.xlu0 %v493, 64
    %v496 = vpop.permute.xlu0 %495
    %v498 = vmul.f32 %v480, %v496
    %500 = vrot.lane.b32.xlu0 %v498, 32
    %v501 = vpop.permute.xlu0 %500
    %503 = vrot.lane.b32.xlu0 %v498, 64
    %v504 = vpop.permute.xlu0 %503
    %v506 = vsel %vm276, %v501, %v504
    %v507 = vmul.f32 %v506, %v127
    %508 = vst.msk [vmem:[#allocation2 + $0x6] sm:$0x3] %vm279, %v501
    %509 = vst.msk [vmem:[#allocation2 + $0x6] sm:$0xc] %vm281, %v504
    %v511 = vrot.slane %v190, 4
    %v513 = vsel %vm206, %v162, %v511
    %v515 = vsel %vm208, %v507, 0
    %517 = vmatpush.msra.mxu0 0.0
    %518 = vmatpush.msra.mxu0 0.0
    %519 = vmatpush.msra.mxu0 0.0
    %520 = vmatpush.msra.mxu0 0.0
    %521 = vmatpush.msra.mxu0 0.0
    %522 = vmatpush.msra.mxu0 0.0
    %523 = vmatpush.msra.mxu0 0.0
    %524 = vmatpush.msra.mxu0 0.0
    %525 = vmatpush.msra.mxu0 %v202
    %526 = vmatpush.msra.mxu0 %v201
    %527 = vmatpush.msra.mxu0 %v200
    %528 = vmatpush.msra.mxu0 %v199
    %529 = vmatpush.msra.mxu0 %v198
    %530 = vmatpush.msra.mxu0 %v197
    %531 = vmatpush.msra.mxu0 %v196
    %532 = vmatpush.msra.mxu0 %v195
    %533 = vmatmul.f32.gmra.mxu0 %v515
    %v534 = vpop.f32.mrf.mxu0
    %v535 = vadd.f32 %v513, %v534
    %536 = vdwg.mxu0
    %v537 = vxor.u32 %v535, 2147483648
    %v538 = vmul.f32 %v537, 1.442695
    %v539 = vpow.pop %v538
    %v540 = vadd.f32 %v539, 1.0
    %v541 = vrcp.pop %v540
    %v542 = vmul.f32 %v540, %v541
    %v543 = vsub.f32 1.0, %v542
    %v544 = vmul.f32 %v541, %v543
    %v545 = vadd.f32 %v541, %v544
    %vm546 = vweird.f32 %v540
    %vm547 = vweird.f32 %v541
    %vm548 = vmor %vm546, %vm547
    %v549 = vsel %vm548, %v541, %v545
    %v550 = vand.u32 2147483647, %v540
    %vm551 = vcmp.eq.f32.partialorder %v550, 8.507059e+37
    %v552 = vand.u32 %v540, 2147483648
    %v553 = vor.u32 1.1754944e-38, %v552
    %v554 = vsel %vm551, %v553, %v549
    %v555 = vmul.f32 1.0, %v554
    %v556 = vtanh.pop %v535
    %v557 = vmul.f32 %v555, %v492
    %559 = vrot.lane.b32.xlu0 %v556, 64
    %v560 = vpop.permute.xlu0 %559
    %v562 = vmul.f32 %v555, %v560
    %564 = vrot.lane.b32.xlu0 %v562, 32
    %v565 = vpop.permute.xlu0 %564
    %v567 = vadd.f32 %v557, %v565
    %v568 = vtanh.pop %v567
    %570 = vrot.lane.b32.xlu0 %v568, 64
    %v571 = vpop.permute.xlu0 %570
    %v573 = vmul.f32 %v555, %v571
    %575 = vrot.lane.b32.xlu0 %v573, 32
    %v576 = vpop.permute.xlu0 %575
    %578 = vrot.lane.b32.xlu0 %v573, 64
    %v579 = vpop.permute.xlu0 %578
    %v581 = vsel %vm276, %v576, %v579
    %v582 = vmul.f32 %v581, %v127
    %583 = vst.msk [vmem:[#allocation2 + $0x8] sm:$0x3] %vm279, %v576
    %584 = vst.msk [vmem:[#allocation2 + $0x4] sm:$0xc] %vm281, %v579
    %v586 = vrot.slane %v162, 2
    %v588 = vrot.slane %v190, 2
    %v590 = vsel %vm206, %v586, %v588
    %v592 = vsel %vm208, %v582, 0
    %594 = vmatpush.msra.mxu0 0.0
    %595 = vmatpush.msra.mxu0 0.0
    %596 = vmatpush.msra.mxu0 0.0
    %597 = vmatpush.msra.mxu0 0.0
    %598 = vmatpush.msra.mxu0 0.0
    %599 = vmatpush.msra.mxu0 0.0
    %600 = vmatpush.msra.mxu0 0.0
    %601 = vmatpush.msra.mxu0 0.0
    %602 = vmatpush.msra.mxu0 %v202
    %603 = vmatpush.msra.mxu0 %v201
    %604 = vmatpush.msra.mxu0 %v200
    %605 = vmatpush.msra.mxu0 %v199
    %606 = vmatpush.msra.mxu0 %v198
    %607 = vmatpush.msra.mxu0 %v197
    %608 = vmatpush.msra.mxu0 %v196
    %609 = vmatpush.msra.mxu0 %v195
    %610 = vmatmul.f32.gmra.mxu0 %v592
    %v611 = vpop.f32.mrf.mxu0
    %v612 = vadd.f32 %v590, %v611
    %613 = vdwg.mxu0
    %v614 = vxor.u32 %v612, 2147483648
    %v615 = vmul.f32 %v614, 1.442695
    %v616 = vpow.pop %v615
    %v617 = vadd.f32 %v616, 1.0
    %v618 = vrcp.pop %v617
    %v619 = vmul.f32 %v617, %v618
    %v620 = vsub.f32 1.0, %v619
    %v621 = vmul.f32 %v618, %v620
    %v622 = vadd.f32 %v618, %v621
    %vm623 = vweird.f32 %v617
    %vm624 = vweird.f32 %v618
    %vm625 = vmor %vm623, %vm624
    %v626 = vsel %vm625, %v618, %v622
    %v627 = vand.u32 2147483647, %v617
    %vm628 = vcmp.eq.f32.partialorder %v627, 8.507059e+37
    %v629 = vand.u32 %v617, 2147483648
    %v630 = vor.u32 1.1754944e-38, %v629
    %v631 = vsel %vm628, %v630, %v626
    %v632 = vmul.f32 1.0, %v631
    %v633 = vtanh.pop %v612
    %v634 = vmul.f32 %v632, %v567
    %636 = vrot.lane.b32.xlu0 %v633, 64
    %v637 = vpop.permute.xlu0 %636
    %v639 = vmul.f32 %v632, %v637
    %641 = vrot.lane.b32.xlu0 %v639, 32
    %v642 = vpop.permute.xlu0 %641
    %v644 = vadd.f32 %v634, %v642
    %v645 = vtanh.pop %v644
    %647 = vrot.lane.b32.xlu0 %v645, 64
    %v648 = vpop.permute.xlu0 %647
    %v650 = vmul.f32 %v632, %v648
    %652 = vrot.lane.b32.xlu0 %v650, 32
    %v653 = vpop.permute.xlu0 %652
    %655 = vrot.lane.b32.xlu0 %v650, 64
    %v656 = vpop.permute.xlu0 %655
    %v658 = vsel %vm276, %v653, %v656
    %v659 = vmul.f32 %v658, %v127
    %660 = vst.msk [vmem:[#allocation2 + $0xa] sm:$0x3] %vm279, %v653
    %661 = vst.msk [vmem:[#allocation2 + $0x2] sm:$0xc] %vm281, %v656
    %v662 = vrot.slane %v162, 4
    %v664 = vsel %vm206, %v662, %v190
    %v666 = vsel %vm208, %v659, 0
    %668 = vmatpush.msra.mxu0 0.0
    %669 = vmatpush.msra.mxu0 0.0
    %670 = vmatpush.msra.mxu0 0.0
    %671 = vmatpush.msra.mxu0 0.0
    %672 = vmatpush.msra.mxu0 0.0
    %673 = vmatpush.msra.mxu0 0.0
    %674 = vmatpush.msra.mxu0 0.0
    %675 = vmatpush.msra.mxu0 0.0
    %676 = vmatpush.msra.mxu0 %v202
    %677 = vmatpush.msra.mxu0 %v201
    %678 = vmatpush.msra.mxu0 %v200
    %679 = vmatpush.msra.mxu0 %v199
    %680 = vmatpush.msra.mxu0 %v198
    %681 = vmatpush.msra.mxu0 %v197
    %682 = vmatpush.msra.mxu0 %v196
    %683 = vmatpush.msra.mxu0 %v195
    %684 = vmatmul.f32.gmra.mxu0 %v666
    %v685 = vpop.f32.mrf.mxu0
    %v686 = vadd.f32 %v664, %v685
    %687 = vdwg.mxu0
    %v688 = vxor.u32 %v686, 2147483648
    %v689 = vmul.f32 %v688, 1.442695
    %v690 = vpow.pop %v689
    %v691 = vadd.f32 %v690, 1.0
    %v692 = vrcp.pop %v691
    %v693 = vmul.f32 %v691, %v692
    %v694 = vsub.f32 1.0, %v693
    %v695 = vmul.f32 %v692, %v694
    %v696 = vadd.f32 %v692, %v695
    %vm697 = vweird.f32 %v691
    %vm698 = vweird.f32 %v692
    %vm699 = vmor %vm697, %vm698
    %v700 = vsel %vm699, %v692, %v696
    %v701 = vand.u32 2147483647, %v691
    %vm702 = vcmp.eq.f32.partialorder %v701, 8.507059e+37
    %v703 = vand.u32 %v691, 2147483648
    %v704 = vor.u32 1.1754944e-38, %v703
    %v705 = vsel %vm702, %v704, %v700
    %v706 = vmul.f32 1.0, %v705
    %v707 = vtanh.pop %v686
    %v708 = vmul.f32 %v706, %v644
    %710 = vrot.lane.b32.xlu0 %v707, 64
    %v711 = vpop.permute.xlu0 %710
    %v713 = vmul.f32 %v706, %v711
    %715 = vrot.lane.b32.xlu0 %v713, 32
    %v716 = vpop.permute.xlu0 %715
    %v718 = vadd.f32 %v708, %v716
    %v719 = vtanh.pop %v718
    %721 = vrot.lane.b32.xlu0 %v719, 64
    %v722 = vpop.permute.xlu0 %721
    %v724 = vmul.f32 %v706, %v722
    %726 = vrot.lane.b32.xlu0 %v724, 32
    %v727 = vpop.permute.xlu0 %726
    %729 = vrot.lane.b32.xlu0 %v724, 64
    %v730 = vpop.permute.xlu0 %729
    %v732 = vsel %vm276, %v727, %v730
    %v733 = vmul.f32 %v732, %v127
    %734 = vst.msk [vmem:[#allocation2 + $0xc] sm:$0x3] %vm279, %v727
    %735 = vst.msk [vmem:[#allocation2] sm:$0xc] %vm281, %v730
    %v736 = vrot.slane %v162, 6
    %v738 = vrot.slane %v190, 6
    %v740 = vsel %vm206, %v736, %v738
    %v742 = vsel %vm208, %v733, 0
    %744 = vmatpush.msra.mxu0 0.0
    %745 = vmatpush.msra.mxu0 0.0
    %746 = vmatpush.msra.mxu0 0.0
    %747 = vmatpush.msra.mxu0 0.0
    %748 = vmatpush.msra.mxu0 0.0
    %749 = vmatpush.msra.mxu0 0.0
    %750 = vmatpush.msra.mxu0 0.0
    %751 = vmatpush.msra.mxu0 0.0
    %752 = vmatpush.msra.mxu0 %v202
    %753 = vmatpush.msra.mxu0 %v201
    %754 = vmatpush.msra.mxu0 %v200
    %755 = vmatpush.msra.mxu0 %v199
    %756 = vmatpush.msra.mxu0 %v198
    %757 = vmatpush.msra.mxu0 %v197
    %758 = vmatpush.msra.mxu0 %v196
    %759 = vmatpush.msra.mxu0 %v195
    %760 = vmatmul.f32.gmra.mxu0 %v742
    %v761 = vpop.f32.mrf.mxu0
    %v762 = vadd.f32 %v740, %v761
    %763 = vdwg.mxu0
    %v764 = vxor.u32 %v762, 2147483648
    %v765 = vmul.f32 %v764, 1.442695
    %v766 = vpow.pop %v765
    %v767 = vadd.f32 %v766, 1.0
    %v768 = vrcp.pop %v767
    %v769 = vmul.f32 %v767, %v768
    %v770 = vsub.f32 1.0, %v769
    %v771 = vmul.f32 %v768, %v770
    %v772 = vadd.f32 %v768, %v771
    %vm773 = vweird.f32 %v767
    %vm774 = vweird.f32 %v768
    %vm775 = vmor %vm773, %vm774
    %v776 = vsel %vm775, %v768, %v772
    %v777 = vand.u32 2147483647, %v767
    %vm778 = vcmp.eq.f32.partialorder %v777, 8.507059e+37
    %v779 = vand.u32 %v767, 2147483648
    %v780 = vor.u32 1.1754944e-38, %v779
    %v781 = vsel %vm778, %v780, %v776
    %v782 = vmul.f32 1.0, %v781
    %v783 = vtanh.pop %v762
    %v784 = vmul.f32 %v782, %v718
    %786 = vrot.lane.b32.xlu0 %v783, 64
    %v787 = vpop.permute.xlu0 %786
    %v789 = vmul.f32 %v782, %v787
    %791 = vrot.lane.b32.xlu0 %v789, 32
    %v792 = vpop.permute.xlu0 %791
    %v794 = vadd.f32 %v784, %v792
    %v795 = vtanh.pop %v794
    %797 = vrot.lane.b32.xlu0 %v795, 64
    %v798 = vpop.permute.xlu0 %797
    %v800 = vmul.f32 %v782, %v798
    %802 = vrot.lane.b32.xlu0 %v800, 32
    %v803 = vpop.permute.xlu0 %802
    %805 = vst.msk [vmem:[#allocation2 + $0xe] sm:$0x3] %vm279, %v803
    %806 = vrot.lane.b32.xlu0 %v800, 64
    %v807 = vpop.permute.xlu0 %806
    %809 = vst.msk [vmem:[#allocation2 - $0x2] sm:$0xc] %vm281, %v807
    %v810 = vld [vmem:[#allocation2] sm:$0xff]
    %v811 = vld [vmem:[#allocation2 + $0x8] sm:$0xff]
    %v812 = vld [vmem:[%s5] sm:$0xff]
    %v813 = vld [vmem:[%s5 + $0x8] sm:$0xff]
    %v814 = vld [vmem:[%s5 + $0x10] sm:$0xff]
    %v815 = vld [vmem:[%s5 + $0x18] sm:$0xff]
    %v816 = vld [vmem:[%s5 + $0x20] sm:$0xff]
    %v817 = vld [vmem:[%s5 + $0x28] sm:$0xff]
    %v818 = vld [vmem:[%s5 + $0x30] sm:$0xff]
    %v819 = vld [vmem:[%s5 + $0x38] sm:$0xff]
    %v820 = vld [vmem:[%s7] sm:$0x1]
    %v822 = vperm.slane %v820, 0
    %v825 = vsel %vm208, %v810, 0
    %v828 = vsel %vm208, %v811, 0
    %830 = vmatpush.msra.mxu0 0.0
    %831 = vmatpush.msra.mxu0 0.0
    %832 = vmatpush.msra.mxu0 0.0
    %833 = vmatpush.msra.mxu0 0.0
    %834 = vmatpush.msra.mxu0 0.0
    %835 = vmatpush.msra.mxu0 0.0
    %836 = vmatpush.msra.mxu0 0.0
    %837 = vmatpush.msra.mxu0 0.0
    %838 = vmatpush.msra.mxu0 %v819
    %839 = vmatpush.msra.mxu0 %v818
    %840 = vmatpush.msra.mxu0 %v817
    %841 = vmatpush.msra.mxu0 %v816
    %842 = vmatpush.msra.mxu0 %v815
    %843 = vmatpush.msra.mxu0 %v814
    %844 = vmatpush.msra.mxu0 %v813
    %845 = vmatpush.msra.mxu0 %v812
    %846 = vmatmul.f32.gmra.mxu0 %v825
    %v847 = vpop.f32.mrf.mxu0
    %v848 = vadd.f32 %v822, %v847
    %849 = vmatmul.f32.gmra.mxu0 %v828
    %v850 = vpop.f32.mrf.mxu0
    %v851 = vadd.f32 %v822, %v850
    %852 = vdwg.mxu0
    %s853 = scalar_lea.vmem %s5, 64
    %v854 = vld [vmem:[%s853] sm:$0xff]
    %v855 = vld [vmem:[%s853 + $0x8] sm:$0xff]
    %v856 = vld [vmem:[%s853 + $0x10] sm:$0xff]
    %v857 = vld [vmem:[%s853 + $0x18] sm:$0xff]
    %v858 = vld [vmem:[%s853 + $0x20] sm:$0xff]
    %v859 = vld [vmem:[%s853 + $0x28] sm:$0xff]
    %v860 = vld [vmem:[%s853 + $0x30] sm:$0xff]
    %v861 = vld [vmem:[%s853 + $0x38] sm:$0xff]
    %s862 = scalar_lea.vmem %s7, 1
    %v863 = vld [vmem:[%s862] sm:$0x1]
    %v865 = vperm.slane %v863, 0
    %867 = vmatpush.msra.mxu0 0.0
    %868 = vmatpush.msra.mxu0 0.0
    %869 = vmatpush.msra.mxu0 0.0
    %870 = vmatpush.msra.mxu0 0.0
    %871 = vmatpush.msra.mxu0 0.0
    %872 = vmatpush.msra.mxu0 0.0
    %873 = vmatpush.msra.mxu0 0.0
    %874 = vmatpush.msra.mxu0 0.0
    %875 = vmatpush.msra.mxu0 %v861
    %876 = vmatpush.msra.mxu0 %v860
    %877 = vmatpush.msra.mxu0 %v859
    %878 = vmatpush.msra.mxu0 %v858
    %879 = vmatpush.msra.mxu0 %v857
    %880 = vmatpush.msra.mxu0 %v856
    %881 = vmatpush.msra.mxu0 %v855
    %882 = vmatpush.msra.mxu0 %v854
    %883 = vmatmul.f32.gmra.mxu0 %v825
    %v884 = vpop.f32.mrf.mxu0
    %v885 = vadd.f32 %v865, %v884
    %886 = vmatmul.f32.gmra.mxu0 %v828
    %v887 = vpop.f32.mrf.mxu0
    %v888 = vadd.f32 %v865, %v887
    %889 = vdwg.mxu0
    %v890 = vld [vmem:[#allocation6] sm:$0xff]
    %v891 = vld [vmem:[#allocation6 + $0x8] sm:$0xff]
    %v892 = vld [vmem:[#allocation6 + $0x10] sm:$0xff]
    %v893 = vld [vmem:[#allocation6 + $0x18] sm:$0xff]
    %v894 = vld [vmem:[#allocation6 + $0x20] sm:$0xff]
    %v895 = vld [vmem:[#allocation6 + $0x28] sm:$0xff]
    %v896 = vld [vmem:[#allocation6 + $0x30] sm:$0xff]
    %v897 = vld [vmem:[#allocation6 + $0x38] sm:$0xff]
    %v899 = vrot.slane %v888, 4
    %v901 = vsel %vm206, %v848, %v899
    %902 = vmatpush.msra.mxu0 0.0
    %903 = vmatpush.msra.mxu0 0.0
    %904 = vmatpush.msra.mxu0 0.0
    %905 = vmatpush.msra.mxu0 0.0
    %906 = vmatpush.msra.mxu0 0.0
    %907 = vmatpush.msra.mxu0 0.0
    %908 = vmatpush.msra.mxu0 0.0
    %909 = vmatpush.msra.mxu0 0.0
    %910 = vmatpush.msra.mxu0 %v897
    %911 = vmatpush.msra.mxu0 %v896
    %912 = vmatpush.msra.mxu0 %v895
    %913 = vmatpush.msra.mxu0 %v894
    %914 = vmatpush.msra.mxu0 %v893
    %915 = vmatpush.msra.mxu0 %v892
    %916 = vmatpush.msra.mxu0 %v891
    %917 = vmatpush.msra.mxu0 %v890
    %918 = vmatmul.f32.gmra.mxu0 %v210
    %v919 = vpop.f32.mrf.mxu0
    %v920 = vadd.f32 %v901, %v919
    %921 = vdwg.mxu0
    %v922 = vxor.u32 %v920, 2147483648
    %v923 = vmul.f32 %v922, 1.442695
    %v924 = vpow.pop %v923
    %v925 = vadd.f32 %v924, 1.0
    %v926 = vrcp.pop %v925
    %v927 = vmul.f32 %v925, %v926
    %v928 = vsub.f32 1.0, %v927
    %v929 = vmul.f32 %v926, %v928
    %v930 = vadd.f32 %v926, %v929
    %vm931 = vweird.f32 %v925
    %vm932 = vweird.f32 %v926
    %vm933 = vmor %vm931, %vm932
    %v934 = vsel %vm933, %v926, %v930
    %v935 = vand.u32 2147483647, %v925
    %vm936 = vcmp.eq.f32.partialorder %v935, 8.507059e+37
    %v937 = vand.u32 %v925, 2147483648
    %v938 = vor.u32 1.1754944e-38, %v937
    %v939 = vsel %vm936, %v938, %v934
    %v940 = vmul.f32 1.0, %v939
    %v941 = vtanh.pop %v920
    %v942 = vmul.f32 %v940, 0.0
    %944 = vrot.lane.b32.xlu0 %v941, 64
    %v945 = vpop.permute.xlu0 %944
    %v947 = vmul.f32 %v940, %v945
    %949 = vrot.lane.b32.xlu0 %v947, 32
    %v950 = vpop.permute.xlu0 %949
    %v952 = vadd.f32 %v942, %v950
    %v953 = vtanh.pop %v952
    %955 = vrot.lane.b32.xlu0 %v953, 64
    %v956 = vpop.permute.xlu0 %955
    %v958 = vmul.f32 %v940, %v956
    %960 = vrot.lane.b32.xlu0 %v958, 32
    %v961 = vpop.permute.xlu0 %960
    %963 = vrot.lane.b32.xlu0 %v958, 64
    %v964 = vpop.permute.xlu0 %963
    %v966 = vsel %vm276, %v961, %v964
    %v967 = vmul.f32 %v966, %v127
    %v969 = vrot.slane %v848, 2
    %v971 = vrot.slane %v888, 2
    %v973 = vsel %vm206, %v969, %v971
    %v975 = vsel %vm208, %v967, 0
    %977 = vmatpush.msra.mxu0 0.0
    %978 = vmatpush.msra.mxu0 0.0
    %979 = vmatpush.msra.mxu0 0.0
    %980 = vmatpush.msra.mxu0 0.0
    %981 = vmatpush.msra.mxu0 0.0
    %982 = vmatpush.msra.mxu0 0.0
    %983 = vmatpush.msra.mxu0 0.0
    %984 = vmatpush.msra.mxu0 0.0
    %985 = vmatpush.msra.mxu0 %v897
    %986 = vmatpush.msra.mxu0 %v896
    %987 = vmatpush.msra.mxu0 %v895
    %988 = vmatpush.msra.mxu0 %v894
    %989 = vmatpush.msra.mxu0 %v893
    %990 = vmatpush.msra.mxu0 %v892
    %991 = vmatpush.msra.mxu0 %v891
    %992 = vmatpush.msra.mxu0 %v890
    %993 = vmatmul.f32.gmra.mxu0 %v975
    %v994 = vpop.f32.mrf.mxu0
    %v995 = vadd.f32 %v973, %v994
    %996 = vdwg.mxu0
    %v997 = vxor.u32 %v995, 2147483648
    %v998 = vmul.f32 %v997, 1.442695
    %v999 = vpow.pop %v998
    %v1000 = vadd.f32 %v999, 1.0
    %v1001 = vrcp.pop %v1000
    %v1002 = vmul.f32 %v1000, %v1001
    %v1003 = vsub.f32 1.0, %v1002
    %v1004 = vmul.f32 %v1001, %v1003
    %v1005 = vadd.f32 %v1001, %v1004
    %vm1006 = vweird.f32 %v1000
    %vm1007 = vweird.f32 %v1001
    %vm1008 = vmor %vm1006, %vm1007
    %v1009 = vsel %vm1008, %v1001, %v1005
    %v1010 = vand.u32 2147483647, %v1000
    %vm1011 = vcmp.eq.f32.partialorder %v1010, 8.507059e+37
    %v1012 = vand.u32 %v1000, 2147483648
    %v1013 = vor.u32 1.1754944e-38, %v1012
    %v1014 = vsel %vm1011, %v1013, %v1009
    %v1015 = vmul.f32 1.0, %v1014
    %v1016 = vtanh.pop %v995
    %v1017 = vmul.f32 %v1015, %v952
    %1019 = vrot.lane.b32.xlu0 %v1016, 64
    %v1020 = vpop.permute.xlu0 %1019
    %v1022 = vmul.f32 %v1015, %v1020
    %1024 = vrot.lane.b32.xlu0 %v1022, 32
    %v1025 = vpop.permute.xlu0 %1024
    %v1027 = vadd.f32 %v1017, %v1025
    %v1028 = vtanh.pop %v1027
    %1030 = vrot.lane.b32.xlu0 %v1028, 64
    %v1031 = vpop.permute.xlu0 %1030
    %v1033 = vmul.f32 %v1015, %v1031
    %1035 = vrot.lane.b32.xlu0 %v1033, 32
    %v1036 = vpop.permute.xlu0 %1035
    %1038 = vrot.lane.b32.xlu0 %v1033, 64
    %v1039 = vpop.permute.xlu0 %1038
    %v1041 = vsel %vm276, %v1036, %v1039
    %v1042 = vmul.f32 %v1041, %v127
    %v1043 = vrot.slane %v848, 4
    %v1045 = vsel %vm206, %v1043, %v888
    %v1047 = vsel %vm208, %v1042, 0
    %1049 = vmatpush.msra.mxu0 0.0
    %1050 = vmatpush.msra.mxu0 0.0
    %1051 = vmatpush.msra.mxu0 0.0
    %1052 = vmatpush.msra.mxu0 0.0
    %1053 = vmatpush.msra.mxu0 0.0
    %1054 = vmatpush.msra.mxu0 0.0
    %1055 = vmatpush.msra.mxu0 0.0
    %1056 = vmatpush.msra.mxu0 0.0
    %1057 = vmatpush.msra.mxu0 %v897
    %1058 = vmatpush.msra.mxu0 %v896
    %1059 = vmatpush.msra.mxu0 %v895
    %1060 = vmatpush.msra.mxu0 %v894
    %1061 = vmatpush.msra.mxu0 %v893
    %1062 = vmatpush.msra.mxu0 %v892
    %1063 = vmatpush.msra.mxu0 %v891
    %1064 = vmatpush.msra.mxu0 %v890
    %1065 = vmatmul.f32.gmra.mxu0 %v1047
    %v1066 = vpop.f32.mrf.mxu0
    %v1067 = vadd.f32 %v1045, %v1066
    %1068 = vdwg.mxu0
    %v1069 = vxor.u32 %v1067, 2147483648
    %v1070 = vmul.f32 %v1069, 1.442695
    %v1071 = vpow.pop %v1070
    %v1072 = vadd.f32 %v1071, 1.0
    %v1073 = vrcp.pop %v1072
    %v1074 = vmul.f32 %v1072, %v1073
    %v1075 = vsub.f32 1.0, %v1074
    %v1076 = vmul.f32 %v1073, %v1075
    %v1077 = vadd.f32 %v1073, %v1076
    %vm1078 = vweird.f32 %v1072
    %vm1079 = vweird.f32 %v1073
    %vm1080 = vmor %vm1078, %vm1079
    %v1081 = vsel %vm1080, %v1073, %v1077
    %v1082 = vand.u32 2147483647, %v1072
    %vm1083 = vcmp.eq.f32.partialorder %v1082, 8.507059e+37
    %v1084 = vand.u32 %v1072, 2147483648
    %v1085 = vor.u32 1.1754944e-38, %v1084
    %v1086 = vsel %vm1083, %v1085, %v1081
    %v1087 = vmul.f32 1.0, %v1086
    %v1088 = vtanh.pop %v1067
    %v1089 = vmul.f32 %v1087, %v1027
    %1091 = vrot.lane.b32.xlu0 %v1088, 64
    %v1092 = vpop.permute.xlu0 %1091
    %v1094 = vmul.f32 %v1087, %v1092
    %1096 = vrot.lane.b32.xlu0 %v1094, 32
    %v1097 = vpop.permute.xlu0 %1096
    %v1099 = vadd.f32 %v1089, %v1097
    %v1100 = vtanh.pop %v1099
    %1102 = vrot.lane.b32.xlu0 %v1100, 64
    %v1103 = vpop.permute.xlu0 %1102
    %v1105 = vmul.f32 %v1087, %v1103
    %1107 = vrot.lane.b32.xlu0 %v1105, 32
    %v1108 = vpop.permute.xlu0 %1107
    %1110 = vrot.lane.b32.xlu0 %v1105, 64
    %v1111 = vpop.permute.xlu0 %1110
    %v1113 = vsel %vm276, %v1108, %v1111
    %v1114 = vmul.f32 %v1113, %v127
    %v1115 = vrot.slane %v848, 6
    %v1117 = vrot.slane %v888, 6
    %v1119 = vsel %vm206, %v1115, %v1117
    %v1121 = vsel %vm208, %v1114, 0
    %1123 = vmatpush.msra.mxu0 0.0
    %1124 = vmatpush.msra.mxu0 0.0
    %1125 = vmatpush.msra.mxu0 0.0
    %1126 = vmatpush.msra.mxu0 0.0
    %1127 = vmatpush.msra.mxu0 0.0
    %1128 = vmatpush.msra.mxu0 0.0
    %1129 = vmatpush.msra.mxu0 0.0
    %1130 = vmatpush.msra.mxu0 0.0
    %1131 = vmatpush.msra.mxu0 %v897
    %1132 = vmatpush.msra.mxu0 %v896
    %1133 = vmatpush.msra.mxu0 %v895
    %1134 = vmatpush.msra.mxu0 %v894
    %1135 = vmatpush.msra.mxu0 %v893
    %1136 = vmatpush.msra.mxu0 %v892
    %1137 = vmatpush.msra.mxu0 %v891
    %1138 = vmatpush.msra.mxu0 %v890
    %1139 = vmatmul.f32.gmra.mxu0 %v1121
    %v1140 = vpop.f32.mrf.mxu0
    %v1141 = vadd.f32 %v1119, %v1140
    %1142 = vdwg.mxu0
    %v1143 = vxor.u32 %v1141, 2147483648
    %v1144 = vmul.f32 %v1143, 1.442695
    %v1145 = vpow.pop %v1144
    %v1146 = vadd.f32 %v1145, 1.0
    %v1147 = vrcp.pop %v1146
    %v1148 = vmul.f32 %v1146, %v1147
    %v1149 = vsub.f32 1.0, %v1148
    %v1150 = vmul.f32 %v1147, %v1149
    %v1151 = vadd.f32 %v1147, %v1150
    %vm1152 = vweird.f32 %v1146
    %vm1153 = vweird.f32 %v1147
    %vm1154 = vmor %vm1152, %vm1153
    %v1155 = vsel %vm1154, %v1147, %v1151
    %v1156 = vand.u32 2147483647, %v1146
    %vm1157 = vcmp.eq.f32.partialorder %v1156, 8.507059e+37
    %v1158 = vand.u32 %v1146, 2147483648
    %v1159 = vor.u32 1.1754944e-38, %v1158
    %v1160 = vsel %vm1157, %v1159, %v1155
    %v1161 = vmul.f32 1.0, %v1160
    %v1162 = vtanh.pop %v1141
    %v1163 = vmul.f32 %v1161, %v1099
    %1165 = vrot.lane.b32.xlu0 %v1162, 64
    %v1166 = vpop.permute.xlu0 %1165
    %v1168 = vmul.f32 %v1161, %v1166
    %1170 = vrot.lane.b32.xlu0 %v1168, 32
    %v1171 = vpop.permute.xlu0 %1170
    %v1173 = vadd.f32 %v1163, %v1171
    %v1174 = vtanh.pop %v1173
    %1176 = vrot.lane.b32.xlu0 %v1174, 64
    %v1177 = vpop.permute.xlu0 %1176
    %v1179 = vmul.f32 %v1161, %v1177
    %1181 = vrot.lane.b32.xlu0 %v1179, 32
    %v1182 = vpop.permute.xlu0 %1181
    %1184 = vrot.lane.b32.xlu0 %v1179, 64
    %v1185 = vpop.permute.xlu0 %1184
    %v1187 = vsel %vm276, %v1182, %v1185
    %v1188 = vmul.f32 %v1187, %v127
    %v1190 = vrot.slane %v885, 4
    %v1192 = vsel %vm206, %v851, %v1190
    %v1194 = vsel %vm208, %v1188, 0
    %1196 = vmatpush.msra.mxu0 0.0
    %1197 = vmatpush.msra.mxu0 0.0
    %1198 = vmatpush.msra.mxu0 0.0
    %1199 = vmatpush.msra.mxu0 0.0
    %1200 = vmatpush.msra.mxu0 0.0
    %1201 = vmatpush.msra.mxu0 0.0
    %1202 = vmatpush.msra.mxu0 0.0
    %1203 = vmatpush.msra.mxu0 0.0
    %1204 = vmatpush.msra.mxu0 %v897
    %1205 = vmatpush.msra.mxu0 %v896
    %1206 = vmatpush.msra.mxu0 %v895
    %1207 = vmatpush.msra.mxu0 %v894
    %1208 = vmatpush.msra.mxu0 %v893
    %1209 = vmatpush.msra.mxu0 %v892
    %1210 = vmatpush.msra.mxu0 %v891
    %1211 = vmatpush.msra.mxu0 %v890
    %1212 = vmatmul.f32.gmra.mxu0 %v1194
    %v1213 = vpop.f32.mrf.mxu0
    %v1214 = vadd.f32 %v1192, %v1213
    %1215 = vdwg.mxu0
    %v1216 = vxor.u32 %v1214, 2147483648
    %v1217 = vmul.f32 %v1216, 1.442695
    %v1218 = vpow.pop %v1217
    %v1219 = vadd.f32 %v1218, 1.0
    %v1220 = vrcp.pop %v1219
    %v1221 = vmul.f32 %v1219, %v1220
    %v1222 = vsub.f32 1.0, %v1221
    %v1223 = vmul.f32 %v1220, %v1222
    %v1224 = vadd.f32 %v1220, %v1223
    %vm1225 = vweird.f32 %v1219
    %vm1226 = vweird.f32 %v1220
    %vm1227 = vmor %vm1225, %vm1226
    %v1228 = vsel %vm1227, %v1220, %v1224
    %v1229 = vand.u32 2147483647, %v1219
    %vm1230 = vcmp.eq.f32.partialorder %v1229, 8.507059e+37
    %v1231 = vand.u32 %v1219, 2147483648
    %v1232 = vor.u32 1.1754944e-38, %v1231
    %v1233 = vsel %vm1230, %v1232, %v1228
    %v1234 = vmul.f32 1.0, %v1233
    %v1235 = vtanh.pop %v1214
    %v1236 = vmul.f32 %v1234, %v1173
    %1238 = vrot.lane.b32.xlu0 %v1235, 64
    %v1239 = vpop.permute.xlu0 %1238
    %v1241 = vmul.f32 %v1234, %v1239
    %1243 = vrot.lane.b32.xlu0 %v1241, 32
    %v1244 = vpop.permute.xlu0 %1243
    %v1246 = vadd.f32 %v1236, %v1244
    %v1247 = vtanh.pop %v1246
    %1249 = vrot.lane.b32.xlu0 %v1247, 64
    %v1250 = vpop.permute.xlu0 %1249
    %v1252 = vmul.f32 %v1234, %v1250
    %1254 = vrot.lane.b32.xlu0 %v1252, 32
    %v1255 = vpop.permute.xlu0 %1254
    %1257 = vrot.lane.b32.xlu0 %v1252, 64
    %v1258 = vpop.permute.xlu0 %1257
    %v1260 = vsel %vm276, %v1255, %v1258
    %v1261 = vmul.f32 %v1260, %v127
    %v1263 = vrot.slane %v851, 2
    %v1265 = vrot.slane %v885, 2
    %v1267 = vsel %vm206, %v1263, %v1265
    %v1269 = vsel %vm208, %v1261, 0
    %1271 = vmatpush.msra.mxu0 0.0
    %1272 = vmatpush.msra.mxu0 0.0
    %1273 = vmatpush.msra.mxu0 0.0
    %1274 = vmatpush.msra.mxu0 0.0
    %1275 = vmatpush.msra.mxu0 0.0
    %1276 = vmatpush.msra.mxu0 0.0
    %1277 = vmatpush.msra.mxu0 0.0
    %1278 = vmatpush.msra.mxu0 0.0
    %1279 = vmatpush.msra.mxu0 %v897
    %1280 = vmatpush.msra.mxu0 %v896
    %1281 = vmatpush.msra.mxu0 %v895
    %1282 = vmatpush.msra.mxu0 %v894
    %1283 = vmatpush.msra.mxu0 %v893
    %1284 = vmatpush.msra.mxu0 %v892
    %1285 = vmatpush.msra.mxu0 %v891
    %1286 = vmatpush.msra.mxu0 %v890
    %1287 = vmatmul.f32.gmra.mxu0 %v1269
    %v1288 = vpop.f32.mrf.mxu0
    %v1289 = vadd.f32 %v1267, %v1288
    %1290 = vdwg.mxu0
    %v1291 = vxor.u32 %v1289, 2147483648
    %v1292 = vmul.f32 %v1291, 1.442695
    %v1293 = vpow.pop %v1292
    %v1294 = vadd.f32 %v1293, 1.0
    %v1295 = vrcp.pop %v1294
    %v1296 = vmul.f32 %v1294, %v1295
    %v1297 = vsub.f32 1.0, %v1296
    %v1298 = vmul.f32 %v1295, %v1297
    %v1299 = vadd.f32 %v1295, %v1298
    %vm1300 = vweird.f32 %v1294
    %vm1301 = vweird.f32 %v1295
    %vm1302 = vmor %vm1300, %vm1301
    %v1303 = vsel %vm1302, %v1295, %v1299
    %v1304 = vand.u32 2147483647, %v1294
    %vm1305 = vcmp.eq.f32.partialorder %v1304, 8.507059e+37
    %v1306 = vand.u32 %v1294, 2147483648
    %v1307 = vor.u32 1.1754944e-38, %v1306
    %v1308 = vsel %vm1305, %v1307, %v1303
    %v1309 = vmul.f32 1.0, %v1308
    %v1310 = vtanh.pop %v1289
    %v1311 = vmul.f32 %v1309, %v1246
    %1313 = vrot.lane.b32.xlu0 %v1310, 64
    %v1314 = vpop.permute.xlu0 %1313
    %v1316 = vmul.f32 %v1309, %v1314
    %1318 = vrot.lane.b32.xlu0 %v1316, 32
    %v1319 = vpop.permute.xlu0 %1318
    %v1321 = vadd.f32 %v1311, %v1319
    %v1322 = vtanh.pop %v1321
    %1324 = vrot.lane.b32.xlu0 %v1322, 64
    %v1325 = vpop.permute.xlu0 %1324
    %v1327 = vmul.f32 %v1309, %v1325
    %1329 = vrot.lane.b32.xlu0 %v1327, 32
    %v1330 = vpop.permute.xlu0 %1329
    %1332 = vrot.lane.b32.xlu0 %v1327, 64
    %v1333 = vpop.permute.xlu0 %1332
    %v1335 = vsel %vm276, %v1330, %v1333
    %v1336 = vmul.f32 %v1335, %v127
    %v1337 = vrot.slane %v851, 4
    %v1339 = vsel %vm206, %v1337, %v885
    %v1341 = vsel %vm208, %v1336, 0
    %1343 = vmatpush.msra.mxu0 0.0
    %1344 = vmatpush.msra.mxu0 0.0
    %1345 = vmatpush.msra.mxu0 0.0
    %1346 = vmatpush.msra.mxu0 0.0
    %1347 = vmatpush.msra.mxu0 0.0
    %1348 = vmatpush.msra.mxu0 0.0
    %1349 = vmatpush.msra.mxu0 0.0
    %1350 = vmatpush.msra.mxu0 0.0
    %1351 = vmatpush.msra.mxu0 %v897
    %1352 = vmatpush.msra.mxu0 %v896
    %1353 = vmatpush.msra.mxu0 %v895
    %1354 = vmatpush.msra.mxu0 %v894
    %1355 = vmatpush.msra.mxu0 %v893
    %1356 = vmatpush.msra.mxu0 %v892
    %1357 = vmatpush.msra.mxu0 %v891
    %1358 = vmatpush.msra.mxu0 %v890
    %1359 = vmatmul.f32.gmra.mxu0 %v1341
    %v1360 = vpop.f32.mrf.mxu0
    %v1361 = vadd.f32 %v1339, %v1360
    %1362 = vdwg.mxu0
    %v1363 = vxor.u32 %v1361, 2147483648
    %v1364 = vmul.f32 %v1363, 1.442695
    %v1365 = vpow.pop %v1364
    %v1366 = vadd.f32 %v1365, 1.0
    %v1367 = vrcp.pop %v1366
    %v1368 = vmul.f32 %v1366, %v1367
    %v1369 = vsub.f32 1.0, %v1368
    %v1370 = vmul.f32 %v1367, %v1369
    %v1371 = vadd.f32 %v1367, %v1370
    %vm1372 = vweird.f32 %v1366
    %vm1373 = vweird.f32 %v1367
    %vm1374 = vmor %vm1372, %vm1373
    %v1375 = vsel %vm1374, %v1367, %v1371
    %v1376 = vand.u32 2147483647, %v1366
    %vm1377 = vcmp.eq.f32.partialorder %v1376, 8.507059e+37
    %v1378 = vand.u32 %v1366, 2147483648
    %v1379 = vor.u32 1.1754944e-38, %v1378
    %v1380 = vsel %vm1377, %v1379, %v1375
    %v1381 = vmul.f32 1.0, %v1380
    %v1382 = vtanh.pop %v1361
    %v1383 = vmul.f32 %v1381, %v1321
    %1385 = vrot.lane.b32.xlu0 %v1382, 64
    %v1386 = vpop.permute.xlu0 %1385
    %v1388 = vmul.f32 %v1381, %v1386
    %1390 = vrot.lane.b32.xlu0 %v1388, 32
    %v1391 = vpop.permute.xlu0 %1390
    %v1393 = vadd.f32 %v1383, %v1391
    %v1394 = vtanh.pop %v1393
    %1396 = vrot.lane.b32.xlu0 %v1394, 64
    %v1397 = vpop.permute.xlu0 %1396
    %v1399 = vmul.f32 %v1381, %v1397
    %1401 = vrot.lane.b32.xlu0 %v1399, 32
    %v1402 = vpop.permute.xlu0 %1401
    %1404 = vrot.lane.b32.xlu0 %v1399, 64
    %v1405 = vpop.permute.xlu0 %1404
    %v1407 = vsel %vm276, %v1402, %v1405
    %v1408 = vmul.f32 %v1407, %v127
    %v1409 = vrot.slane %v851, 6
    %v1411 = vrot.slane %v885, 6
    %v1413 = vsel %vm206, %v1409, %v1411
    %v1415 = vsel %vm208, %v1408, 0
    %1417 = vmatpush.msra.mxu0 0.0
    %1418 = vmatpush.msra.mxu0 0.0
    %1419 = vmatpush.msra.mxu0 0.0
    %1420 = vmatpush.msra.mxu0 0.0
    %1421 = vmatpush.msra.mxu0 0.0
    %1422 = vmatpush.msra.mxu0 0.0
    %1423 = vmatpush.msra.mxu0 0.0
    %1424 = vmatpush.msra.mxu0 0.0
    %1425 = vmatpush.msra.mxu0 %v897
    %1426 = vmatpush.msra.mxu0 %v896
    %1427 = vmatpush.msra.mxu0 %v895
    %1428 = vmatpush.msra.mxu0 %v894
    %1429 = vmatpush.msra.mxu0 %v893
    %1430 = vmatpush.msra.mxu0 %v892
    %1431 = vmatpush.msra.mxu0 %v891
    %1432 = vmatpush.msra.mxu0 %v890
    %1433 = vmatmul.f32.gmra.mxu0 %v1415
    %v1434 = vpop.f32.mrf.mxu0
    %v1435 = vadd.f32 %v1413, %v1434
    %1436 = vdwg.mxu0
    %v1437 = vxor.u32 %v1435, 2147483648
    %v1438 = vmul.f32 %v1437, 1.442695
    %v1439 = vpow.pop %v1438
    %v1440 = vadd.f32 %v1439, 1.0
    %v1441 = vrcp.pop %v1440
    %v1442 = vmul.f32 %v1440, %v1441
    %v1443 = vsub.f32 1.0, %v1442
    %v1444 = vmul.f32 %v1441, %v1443
    %v1445 = vadd.f32 %v1441, %v1444
    %vm1446 = vweird.f32 %v1440
    %vm1447 = vweird.f32 %v1441
    %vm1448 = vmor %vm1446, %vm1447
    %v1449 = vsel %vm1448, %v1441, %v1445
    %v1450 = vand.u32 2147483647, %v1440
    %vm1451 = vcmp.eq.f32.partialorder %v1450, 8.507059e+37
    %v1452 = vand.u32 %v1440, 2147483648
    %v1453 = vor.u32 1.1754944e-38, %v1452
    %v1454 = vsel %vm1451, %v1453, %v1449
    %v1455 = vmul.f32 1.0, %v1454
    %v1456 = vtanh.pop %v1435
    %v1457 = vmul.f32 %v1455, %v1393
    %1459 = vrot.lane.b32.xlu0 %v1456, 64
    %v1460 = vpop.permute.xlu0 %1459
    %v1462 = vmul.f32 %v1455, %v1460
    %1464 = vrot.lane.b32.xlu0 %v1462, 32
    %v1465 = vpop.permute.xlu0 %1464
    %v1467 = vadd.f32 %v1457, %v1465
    %v1468 = vtanh.pop %v1467
    %1470 = vrot.lane.b32.xlu0 %v1468, 64
    %v1471 = vpop.permute.xlu0 %1470
    %v1473 = vmul.f32 %v1455, %v1471
    %1475 = vrot.lane.b32.xlu0 %v1473, 32
    %v1476 = vpop.permute.xlu0 %1475
    %v1478 = vrot.slane %v1473, 2
    %1479 = vrot.lane.b32.xlu0 %v1478, 64
    %v1480 = vpop.permute.xlu0 %1479
    %v1482 = vsel %vm276, %v1476, %v1480
    %v1483 = vld [vmem:[%s8] sm:$0xff]
    %v1484 = vld [vmem:[%s8 + $0x8] sm:$0xff]
    %v1485 = vld [vmem:[%s8 + $0x10] sm:$0xff]
    %v1486 = vld [vmem:[%s8 + $0x18] sm:$0xff]
    %v1487 = vld [vmem:[%s8 + $0x20] sm:$0xff]
    %v1488 = vld [vmem:[%s8 + $0x28] sm:$0xff]
    %v1489 = vld [vmem:[%s8 + $0x30] sm:$0xff]
    %v1490 = vld [vmem:[%s8 + $0x38] sm:$0xff]
    %v1491 = vld [vmem:[%s9] sm:$0x1]
    %v1493 = vperm.slane %v1491, 0
    %v1496 = vsel %vm208, %v1482, 0
    %1498 = vmatpush.msra.mxu0 0.0
    %1499 = vmatpush.msra.mxu0 0.0
    %1500 = vmatpush.msra.mxu0 0.0
    %1501 = vmatpush.msra.mxu0 0.0
    %1502 = vmatpush.msra.mxu0 0.0
    %1503 = vmatpush.msra.mxu0 0.0
    %1504 = vmatpush.msra.mxu0 0.0
    %1505 = vmatpush.msra.mxu0 0.0
    %1506 = vmatpush.msra.mxu0 %v1490
    %1507 = vmatpush.msra.mxu0 %v1489
    %1508 = vmatpush.msra.mxu0 %v1488
    %1509 = vmatpush.msra.mxu0 %v1487
    %1510 = vmatpush.msra.mxu0 %v1486
    %1511 = vmatpush.msra.mxu0 %v1485
    %1512 = vmatpush.msra.mxu0 %v1484
    %1513 = vmatpush.msra.mxu0 %v1483
    %1514 = vmatmul.f32.gmra.mxu0 %v1496
    %v1515 = vpop.f32.mrf.mxu0
    %v1516 = vadd.f32 %v1493, %v1515
    %1517 = vdwg.mxu0
    %vm1518 = vcmask 25600
    %1519 = vst.msk [vmem:[#allocation8] sm:$0x3] %vm1518, %v1516
    // Predicated region
    $region50: #{textrnn_forward.1} parent=1 // pred_check
      _
    $region51: #{textrnn_forward.1} parent=1 // pred_check_branch
      %1521 = sbr.rel (0) target = $region53
    $region52: #{textrnn_forward.1} parent=1 // pred_region
      %1523 = vsyncadd [#allocation5], 0
      %s1525 = sshll.u32 [#allocation8], 4
      %s1526 = int_to_ptr.vmem [resolvable:$true] %s1525
      %s1527 = sshll.u32 %s10, 4
      %s1528 = int_to_ptr.hbm [resolvable:$true] %s1527
      %1530 = dma.vmem_to_hbm [thread:$0]  %s1526, 32, %s1528, [#allocation5]
    $region53: #{textrnn_forward.1} parent=1 // pred_fallthru
      _
    // Predicated region
    $region54: #{textrnn_forward.1} parent=1 // pred_check
      _
    $region55: #{textrnn_forward.1} parent=1 // pred_check_branch
      %1532 = sbr.rel (0) target = $region57
    $region56: #{textrnn_forward.1} parent=1 // pred_region
      %1534 = dma.done [#allocation5], 32
    $region57: #{textrnn_forward.1} parent=1 // pred_fallthru
      _
    %1535 = vsyncpa [#allocation4], 1
    %1536 = vsyncpa [#allocation7], 1
    %1537 = vsyncpa [#allocation5], 1

</llo_original>
